<compile_context>
chip_gen: v6e
topology: v6e:2x2x1
jax: 0.10.0
libtpu: 0.0.40
codegen_flags: <defaults>
</compile_context>

<pallas_src>
import functools
import numpy as np
import jax
import jax.numpy as jnp
from jax import lax
from jax.experimental import pallas as pl
from jax.experimental.pallas import tpu as pltpu


def _bilinear_matrix(out_size, in_size):
    """align_corners=True bilinear interpolation matrix, shape (out_size, in_size)."""
    if out_size == 1:
        m = np.zeros((1, in_size), np.float32)
        m[0, 0] = 1.0
        return m
    src = np.arange(out_size, dtype=np.float64) * (in_size - 1) / (out_size - 1)
    i0 = np.clip(np.floor(src).astype(np.int64), 0, in_size - 1)
    i1 = np.clip(i0 + 1, 0, in_size - 1)
    frac = (src - i0).astype(np.float32)
    m = np.zeros((out_size, in_size), np.float32)
    m[np.arange(out_size), i0] += 1.0 - frac
    m[np.arange(out_size), i1] += frac
    return m


# ---------------------------------------------------------------------------
# Fully fused kernel.  grid = (2*N,), sequential ("arbitrary").
#   i <  N : phase 0 -> per-image downsample+conv into y_sc (VMEM scratch)
#   i == N : BN batch stats -> fused scale/bias expanded to (Cout*Ho, 1)
#   i >= N : phase 1 -> BN-apply + ReLU + separable bilinear upsample + store
# ---------------------------------------------------------------------------
def _maspp_kernel(x_ref, cw_ref, ghat_ref, uwt_ref, uh_ref, esel_ref, eexp_ref,
                  onesw_ref, gamma_ref, beta_ref, o_ref, y_sc, scbi_sc,
                  *, n_img, cout, ho, wo, k, eps, mxu_dtype):
    # x_ref    : (1, Cin*H, W)        one image, channel-major stacked rows
    # cw_ref   : (K, W, Wo)           width downsample + conv kx-shift + zero pad
    # ghat_ref : (K, Cout*Ho, Cin*H)  conv ky-taps folded with height downsample
    # uwt_ref  : (Wo, W), uh_ref: (H, Ho)   separable bilinear upsample
    # esel_ref : (Cout, Cout*Ho), eexp_ref: (Cout*Ho, Cout), onesw_ref: (Wo, 1)
    # gamma/beta: (Cout, 1)
    # o_ref    : (1, Cout, H, W)
    # y_sc     : VMEM (N, Cout*Ho, Wo)   conv outputs (never hit HBM)
    # scbi_sc  : VMEM (2, Cout*Ho, 1)    fused BN scale / bias, row-expanded
    i = pl.program_id(0)
    f32 = jnp.float32

    # ---------------- phase 0: downsample + conv (no in-kernel relayouts) ---
    @pl.when(i < n_img)
    def _phase0():
        xin = x_ref[0].astype(mxu_dtype)                       # (Cin*H, W)
        acc = jnp.zeros((cout * ho, wo), f32)
        for kx in range(k):                                    # static, K taps
            xw = jnp.dot(xin, cw_ref[kx],
                         preferred_element_type=f32)           # (Cin*H, Wo)
            acc = acc + jnp.dot(ghat_ref[kx], xw.astype(mxu_dtype),
                                preferred_element_type=f32)    # (Cout*Ho, Wo)
        y_sc[i] = acc

    # ---------------- BN batch statistics (once, all on MXU/VPU/EUP) --------
    @pl.when(i == n_img)
    def _stats():
        y_all = y_sc[...]                                      # (N, Cout*Ho, Wo)
        ssum = jnp.sum(y_all, axis=0)                          # VPU adds
        ssq = jnp.sum(y_all * y_all, axis=0)
        # per-channel sums via ones/selection matmuls (no XLU cross-lane reduce)
        row_sum = jnp.dot(ssum, onesw_ref[...], preferred_element_type=f32)
        row_ssq = jnp.dot(ssq, onesw_ref[...], preferred_element_type=f32)
        ch_sum = jnp.dot(esel_ref[...], row_sum, preferred_element_type=f32)
        ch_ssq = jnp.dot(esel_ref[...], row_ssq, preferred_element_type=f32)
        inv_count = 1.0 / float(n_img * ho * wo)
        mean = ch_sum * inv_count                              # (Cout, 1)
        var = jnp.maximum(ch_ssq * inv_count - mean * mean, 0.0)
        sc = gamma_ref[...] * lax.rsqrt(var + eps)             # (Cout, 1)
        bi = beta_ref[...] - mean * sc
        # expand per-channel -> per-row on the MXU (no jnp.repeat relayout)
        scbi_sc[0] = jnp.dot(eexp_ref[...], sc, preferred_element_type=f32)
        scbi_sc[1] = jnp.dot(eexp_ref[...], bi, preferred_element_type=f32)

    # ---------------- phase 1: BN + ReLU + separable bilinear upsample ------
    @pl.when(i >= n_img)
    def _phase1():
        n = i - n_img
        z = jnp.maximum(y_sc[n] * scbi_sc[0] + scbi_sc[1], 0.0)   # (Cout*Ho, Wo)
        zw = jnp.dot(z.astype(mxu_dtype), uwt_ref[...],
                     preferred_element_type=f32)                  # (Cout*Ho, W)
        # height upsample per channel; the slices are static and
        # sublane-tile-aligned (Ho multiple of 8 here) -> pure vreg selection.
        for co in range(cout):
            o_ref[0, co] = jnp.dot(
                uh_ref[...], zw[co * ho:(co + 1) * ho, :].astype(mxu_dtype),
                preferred_element_type=f32).astype(o_ref.dtype)


# ---------------------------------------------------------------------------
# Builder: one-time host-side constant folding + a jitted forward(x).
# ---------------------------------------------------------------------------
def make_m_aspp_forward(conv_w, bn_gamma, bn_beta, scale, padding, input_shape,
                        eps=1e-5, mxu_dtype=jnp.float32):
    # mxu_dtype=jnp.bfloat16 is recommended on v6e/v7x (constants pre-cast
    # below, f32 accumulation kept); default f32 matches the PyTorch reference.
    N, Cin, H, W = (int(s) for s in input_shape)
    conv_w = np.asarray(conv_w, np.float32)                     # (Cout, Cin, K, K)
    Cout, Cin_w, K, K2 = conv_w.shape
    assert Cin_w == Cin and K2 == K

    h2, w2 = int(H / scale), int(W / scale)                     # matches int(h/scale)
    hp, wp = h2 + 2 * padding, w2 + 2 * padding
    Ho, Wo = hp - K + 1, wp - K + 1
    assert Ho >= 1 and Wo >= 1

    # ---- host-side constant folding (hoisted out of the per-call path) -----
    Rh = _bilinear_matrix(h2, H)                                # (h2, H)
    Rw = _bilinear_matrix(w2, W)                                # (w2, W)
    Rh_p = np.zeros((hp, H), np.float32); Rh_p[padding:padding + h2] = Rh
    Rw_p = np.zeros((wp, W), np.float32); Rw_p[padding:padding + w2] = Rw

    # width downsample + zero pad + conv kx-shift, one (W, Wo) matrix per kx
    cw = np.stack([Rw_p.T[:, kx:kx + Wo] for kx in range(K)], axis=0)      # (K, W, Wo)
    # conv ky-taps folded with the (padded) height downsample:
    #   ghat[kx, co*Ho+i, ci*H+h] = sum_ky w[co,ci,ky,kx] * Rh_p[i+ky, h]
    Ah = np.stack([Rh_p[ky:ky + Ho, :] for ky in range(K)], axis=0)        # (K, Ho, H)
    ghat = np.einsum('ocyx,yih->xoich', conv_w, Ah).reshape(K, Cout * Ho, Cin * H)
    # NOTE: ghat scales as K*Cout*Ho*Cin*H; for very large Cin/Cout keep the
    # height-resize un-folded (per-channel) instead.

    # separable bilinear upsample (no dense kron -> v7x VMEM safe at any H/W)
    Uh = _bilinear_matrix(H, Ho)                                # (H, Ho)
    Uw = _bilinear_matrix(W, Wo)                                # (W, Wo)
    uwt = np.ascontiguousarray(Uw.T)                            # (Wo, W)

    # MXU helpers: per-channel row-group sum / sublane broadcast as matmuls
    esel = np.kron(np.eye(Cout, dtype=np.float32),
                   np.ones((1, Ho), np.float32))                # (Cout, Cout*Ho)
    eexp = np.ascontiguousarray(esel.T)                         # (Cout*Ho, Cout)
    onesw = np.ones((Wo, 1), np.float32)

    consts = (
        jnp.asarray(cw, mxu_dtype),
        jnp.asarray(ghat, mxu_dtype),
        jnp.asarray(uwt, mxu_dtype),
        jnp.asarray(Uh, mxu_dtype),
        jnp.asarray(esel, jnp.float32),
        jnp.asarray(eexp, jnp.float32),
        jnp.asarray(onesw, jnp.float32),
        jnp.asarray(np.asarray(bn_gamma, np.float32).reshape(Cout, 1)),
        jnp.asarray(np.asarray(bn_beta, np.float32).reshape(Cout, 1)),
    )

    kernel = functools.partial(_maspp_kernel, n_img=N, cout=Cout, ho=Ho, wo=Wo,
                               k=K, eps=float(eps), mxu_dtype=mxu_dtype)

    # ---- VMEM budget derived from the actual footprint (v7x: 64 MiB total) --
    const_bytes = sum(int(np.prod(c.shape)) * c.dtype.itemsize for c in consts)
    block_bytes = (Cin * H * W + Cout * H * W) * 4              # x tile + out tile
    scratch_bytes = (N * Cout * Ho * Wo + 2 * Cout * Ho) * 4
    vmem_limit = int(min(max(2 * (2 * block_bytes + const_bytes + scratch_bytes),
                             4 << 20), 48 << 20))

    # grid-invariant operands: whole-array, VMEM-resident, single-buffered
    const_specs = [pl.BlockSpec(memory_space=pltpu.MemorySpace.VMEM)
                   for _ in consts]

    fused = pl.pallas_call(
        kernel,
        grid=(2 * N,),
        out_shape=jax.ShapeDtypeStruct((N, Cout, H, W), jnp.float32),
        in_specs=[
            # image tile, double-buffered; clamped index -> no extra DMAs in phase 1
            pl.BlockSpec((1, Cin * H, W), lambda i: (jnp.minimum(i, N - 1), 0, 0)),
        ] + const_specs,
        # phase 0 never touches the output; block index is monotone, each image
        # block is written exactly once (at its phase-1 step).
        out_specs=pl.BlockSpec((1, Cout, H, W),
                               lambda i: (jnp.maximum(i - N, 0), 0, 0, 0)),
        scratch_shapes=[pltpu.VMEM((N, Cout * Ho, Wo), jnp.float32),
                        pltpu.VMEM((2, Cout * Ho, 1), jnp.float32)],
        compiler_params=pltpu.CompilerParams(
            dimension_semantics=("arbitrary",),
            vmem_limit_bytes=vmem_limit),
    )

    @jax.jit
    def forward(x):
        x_rows = x.astype(jnp.float32).reshape(N, Cin * H, W)   # free reshape
        return fused(x_rows, *consts)

    return forward


# ---------------------------------------------------------------------------
# Pure-JAX reference (same math, standard XLA ops) for a correctness check.
# ---------------------------------------------------------------------------
def _reference_forward(x, conv_w, gamma, beta, scale, padding, eps=1e-5):
    N, Cin, H, W = x.shape
    h2, w2 = int(H / scale), int(W / scale)
    Rh = jnp.asarray(_bilinear_matrix(h2, H))
    Rw = jnp.asarray(_bilinear_matrix(w2, W))
    xd = jnp.einsum('ah,nchw,bw->ncab', Rh, x, Rw)
    y = lax.conv_general_dilated(xd, jnp.asarray(conv_w), (1, 1),
                                 ((padding, padding), (padding, padding)),
                                 dimension_numbers=('NCHW', 'OIHW', 'NCHW'))
    mean = jnp.mean(y, axis=(0, 2, 3), keepdims=True)
    var = jnp.mean((y - mean) ** 2, axis=(0, 2, 3), keepdims=True)
    z = (y - mean) / jnp.sqrt(var + eps) * gamma.reshape(1, -1, 1, 1) \
        + beta.reshape(1, -1, 1, 1)
    z = jnp.maximum(z, 0.0)
    Ho, Wo = z.shape[2], z.shape[3]
    Uh = jnp.asarray(_bilinear_matrix(H, Ho))
    Uw = jnp.asarray(_bilinear_matrix(W, Wo))
    return jnp.einsum('ya,ncab,xb->ncyx', Uh, z, Uw)


if __name__ == "__main__":
    # M_ASPPModule(inplanes=4, planes=4, kernel_size=3, scale=2, padding=1)
    N, Cin, H, W = 2, 4, 16, 16
    Cout, K, scale, padding = 4, 3, 2, 1

    key = jax.random.PRNGKey(0)
    kx_key, kw_key = jax.random.split(key)
    x = jax.random.normal(kx_key, (N, Cin, H, W), dtype=jnp.float32)

    # kaiming_normal_-style deterministic synthetic init (fan_in, gain=sqrt(2))
    fan_in = Cin * K * K
    conv_w = jax.random.normal(kw_key, (Cout, Cin, K, K), dtype=jnp.float32) \
        * np.sqrt(2.0 / fan_in)
    bn_gamma = jnp.ones((Cout,), jnp.float32)   # bn.weight.fill_(1)
    bn_beta = jnp.zeros((Cout,), jnp.float32)   # bn.bias.zero_()

    forward = make_m_aspp_forward(conv_w, bn_gamma, bn_beta, scale, padding,
                                  input_shape=(N, Cin, H, W))
    out = forward(x)
    jax.block_until_ready(out)
    assert out.shape == (N, Cout, H, W)

    ref = _reference_forward(x, conv_w, bn_gamma, bn_beta, scale, padding)
    np.testing.assert_allclose(np.asarray(out), np.asarray(ref),
                               rtol=2e-3, atol=2e-3)

    print("KERNEL_OK")
</pallas_src>

<mosaic_0001>
module attributes {stable_mosaic.version = 11 : i64} {
  func.func @_maspp_kernel(%arg0: i32, %arg1: memref<1x64x16xf32, #tpu.memory_space<vmem>>, %arg2: memref<3x16x8xf32, #tpu.memory_space<vmem>>, %arg3: memref<3x32x64xf32, #tpu.memory_space<vmem>>, %arg4: memref<8x16xf32, #tpu.memory_space<vmem>>, %arg5: memref<16x8xf32, #tpu.memory_space<vmem>>, %arg6: memref<4x32xf32, #tpu.memory_space<vmem>>, %arg7: memref<32x4xf32, #tpu.memory_space<vmem>>, %arg8: memref<8x1xf32, #tpu.memory_space<vmem>>, %arg9: memref<4x1xf32, #tpu.memory_space<vmem>>, %arg10: memref<4x1xf32, #tpu.memory_space<vmem>>, %arg11: memref<1x4x16x16xf32, #tpu.memory_space<vmem>>, %arg12: memref<2x32x8xf32, #tpu.memory_space<vmem>>, %arg13: memref<2x32x1xf32, #tpu.memory_space<vmem>>) attributes {dimension_semantics = [#tpu.dimension_semantics<arbitrary>], iteration_bounds = array<i64: 4>, scalar_prefetch = 0 : i64, scratch_operands = 2 : i64, tpu.core_type = #tpu.core_type<tc>, window_params = [{transform_indices = @transform_0, window_bounds = array<i64: 1, 64, 16>}, {pipeline_mode = #tpu.pipeline_mode<synchronous>, transform_indices = @transform_1, window_bounds = array<i64: 3, 16, 8>}, {pipeline_mode = #tpu.pipeline_mode<synchronous>, transform_indices = @transform_2, window_bounds = array<i64: 3, 32, 64>}, {pipeline_mode = #tpu.pipeline_mode<synchronous>, transform_indices = @transform_3, window_bounds = array<i64: 8, 16>}, {pipeline_mode = #tpu.pipeline_mode<synchronous>, transform_indices = @transform_4, window_bounds = array<i64: 16, 8>}, {pipeline_mode = #tpu.pipeline_mode<synchronous>, transform_indices = @transform_5, window_bounds = array<i64: 4, 32>}, {pipeline_mode = #tpu.pipeline_mode<synchronous>, transform_indices = @transform_6, window_bounds = array<i64: 32, 4>}, {pipeline_mode = #tpu.pipeline_mode<synchronous>, transform_indices = @transform_7, window_bounds = array<i64: 8, 1>}, {pipeline_mode = #tpu.pipeline_mode<synchronous>, transform_indices = @transform_8, window_bounds = array<i64: 4, 1>}, {pipeline_mode = #tpu.pipeline_mode<synchronous>, transform_indices = @transform_9, window_bounds = array<i64: 4, 1>}, {transform_indices = @transform_10, window_bounds = array<i64: 1, 4, 16, 16>}]} {
    %c2_i32 = arith.constant 2 : i32
    %0 = arith.cmpi slt, %arg0, %c2_i32 : i32
    %1 = arith.extui %0 : i1 to i32
    %c0_i32 = arith.constant 0 : i32
    %2 = arith.cmpi ne, %1, %c0_i32 : i32
    scf.if %2 {
      %c0 = arith.constant 0 : index
      %c0_4 = arith.constant 0 : index
      %c0_5 = arith.constant 0 : index
      %9 = vector.load %arg1[%c0, %c0_4, %c0_5] : memref<1x64x16xf32, #tpu.memory_space<vmem>>, vector<1x64x16xf32>
      %10 = vector.shape_cast %9 : vector<1x64x16xf32> to vector<64x16xf32>
      %cst = arith.constant 0.000000e+00 : f32
      %11 = vector.broadcast %cst : f32 to vector<32x8xf32>
      %c0_6 = arith.constant 0 : index
      %c0_7 = arith.constant 0 : index
      %c0_8 = arith.constant 0 : index
      %12 = vector.load %arg2[%c0_6, %c0_7, %c0_8] : memref<3x16x8xf32, #tpu.memory_space<vmem>>, vector<1x16x8xf32>
      %13 = vector.shape_cast %12 : vector<1x16x8xf32> to vector<16x8xf32>
      %cst_9 = arith.constant dense<0.000000e+00> : vector<64x8xf32>
      %14 = tpu.matmul %10, %13, %cst_9 {dimension_numbers = #tpu.dot_dimension_numbers<[1], [0], [0], [1], [0, 0, 1, 1], [], []>} : vector<64x16xf32>, vector<16x8xf32>, vector<64x8xf32> -> vector<64x8xf32>
      %c0_10 = arith.constant 0 : index
      %c0_11 = arith.constant 0 : index
      %c0_12 = arith.constant 0 : index
      %15 = vector.load %arg3[%c0_10, %c0_11, %c0_12] : memref<3x32x64xf32, #tpu.memory_space<vmem>>, vector<1x32x64xf32>
      %16 = vector.shape_cast %15 : vector<1x32x64xf32> to vector<32x64xf32>
      %cst_13 = arith.constant dense<0.000000e+00> : vector<32x8xf32>
      %17 = tpu.matmul %16, %14, %cst_13 {dimension_numbers = #tpu.dot_dimension_numbers<[1], [0], [0], [1], [0, 0, 1, 1], [], []>} : vector<32x64xf32>, vector<64x8xf32>, vector<32x8xf32> -> vector<32x8xf32>
      %18 = arith.addf %11, %17 : vector<32x8xf32>
      %c1 = arith.constant 1 : index
      %c0_14 = arith.constant 0 : index
      %c0_15 = arith.constant 0 : index
      %19 = vector.load %arg2[%c1, %c0_14, %c0_15] : memref<3x16x8xf32, #tpu.memory_space<vmem>>, vector<1x16x8xf32>
      %20 = vector.shape_cast %19 : vector<1x16x8xf32> to vector<16x8xf32>
      %cst_16 = arith.constant dense<0.000000e+00> : vector<64x8xf32>
      %21 = tpu.matmul %10, %20, %cst_16 {dimension_numbers = #tpu.dot_dimension_numbers<[1], [0], [0], [1], [0, 0, 1, 1], [], []>} : vector<64x16xf32>, vector<16x8xf32>, vector<64x8xf32> -> vector<64x8xf32>
      %c1_17 = arith.constant 1 : index
      %c0_18 = arith.constant 0 : index
      %c0_19 = arith.constant 0 : index
      %22 = vector.load %arg3[%c1_17, %c0_18, %c0_19] : memref<3x32x64xf32, #tpu.memory_space<vmem>>, vector<1x32x64xf32>
      %23 = vector.shape_cast %22 : vector<1x32x64xf32> to vector<32x64xf32>
      %cst_20 = arith.constant dense<0.000000e+00> : vector<32x8xf32>
      %24 = tpu.matmul %23, %21, %cst_20 {dimension_numbers = #tpu.dot_dimension_numbers<[1], [0], [0], [1], [0, 0, 1, 1], [], []>} : vector<32x64xf32>, vector<64x8xf32>, vector<32x8xf32> -> vector<32x8xf32>
      %25 = arith.addf %18, %24 : vector<32x8xf32>
      %c2 = arith.constant 2 : index
      %c0_21 = arith.constant 0 : index
      %c0_22 = arith.constant 0 : index
      %26 = vector.load %arg2[%c2, %c0_21, %c0_22] : memref<3x16x8xf32, #tpu.memory_space<vmem>>, vector<1x16x8xf32>
      %27 = vector.shape_cast %26 : vector<1x16x8xf32> to vector<16x8xf32>
      %cst_23 = arith.constant dense<0.000000e+00> : vector<64x8xf32>
      %28 = tpu.matmul %10, %27, %cst_23 {dimension_numbers = #tpu.dot_dimension_numbers<[1], [0], [0], [1], [0, 0, 1, 1], [], []>} : vector<64x16xf32>, vector<16x8xf32>, vector<64x8xf32> -> vector<64x8xf32>
      %c2_24 = arith.constant 2 : index
      %c0_25 = arith.constant 0 : index
      %c0_26 = arith.constant 0 : index
      %29 = vector.load %arg3[%c2_24, %c0_25, %c0_26] : memref<3x32x64xf32, #tpu.memory_space<vmem>>, vector<1x32x64xf32>
      %30 = vector.shape_cast %29 : vector<1x32x64xf32> to vector<32x64xf32>
      %cst_27 = arith.constant dense<0.000000e+00> : vector<32x8xf32>
      %31 = tpu.matmul %30, %28, %cst_27 {dimension_numbers = #tpu.dot_dimension_numbers<[1], [0], [0], [1], [0, 0, 1, 1], [], []>} : vector<32x64xf32>, vector<64x8xf32>, vector<32x8xf32> -> vector<32x8xf32>
      %32 = arith.addf %25, %31 : vector<32x8xf32>
      %33 = arith.index_cast %arg0 : i32 to index
      %c0_28 = arith.constant 0 : index
      %c0_29 = arith.constant 0 : index
      %34 = vector.load %arg12[%33, %c0_28, %c0_29] : memref<2x32x8xf32, #tpu.memory_space<vmem>>, vector<1x32x8xf32>
      %35 = vector.shape_cast %34 : vector<1x32x8xf32> to vector<32x8xf32>
      %36 = vector.shape_cast %32 : vector<32x8xf32> to vector<1x32x8xf32>
      tpu.vector_store %arg12[%33, %c0_28, %c0_29], %36 {strides = array<i32>} : memref<2x32x8xf32, #tpu.memory_space<vmem>>, vector<1x32x8xf32>,
    } else {
    }
    %c2_i32_0 = arith.constant 2 : i32
    %3 = arith.cmpi eq, %arg0, %c2_i32_0 : i32
    %4 = arith.extui %3 : i1 to i32
    %c0_i32_1 = arith.constant 0 : i32
    %5 = arith.cmpi ne, %4, %c0_i32_1 : i32
    scf.if %5 {
      %c0 = arith.constant 0 : index
      %c0_4 = arith.constant 0 : index
      %c0_5 = arith.constant 0 : index
      %9 = vector.load %arg12[%c0, %c0_4, %c0_5] : memref<2x32x8xf32, #tpu.memory_space<vmem>>, vector<2x32x8xf32>
      %cst = arith.constant dense<0.000000e+00> : vector<32x8xf32>
      %10 = vector.multi_reduction <add>, %9, %cst [0] : vector<2x32x8xf32> to vector<32x8xf32>
      %11 = arith.mulf %9, %9 : vector<2x32x8xf32>
      %cst_6 = arith.constant dense<0.000000e+00> : vector<32x8xf32>
      %12 = vector.multi_reduction <add>, %11, %cst_6 [0] : vector<2x32x8xf32> to vector<32x8xf32>
      %c0_7 = arith.constant 0 : index
      %c0_8 = arith.constant 0 : index
      %13 = vector.load %arg8[%c0_7, %c0_8] : memref<8x1xf32, #tpu.memory_space<vmem>>, vector<8x1xf32>
      %cst_9 = arith.constant dense<0.000000e+00> : vector<32x1xf32>
      %14 = tpu.matmul %10, %13, %cst_9 {dimension_numbers = #tpu.dot_dimension_numbers<[1], [0], [0], [1], [0, 0, 1, 1], [], []>} : vector<32x8xf32>, vector<8x1xf32>, vector<32x1xf32> -> vector<32x1xf32>
      %c0_10 = arith.constant 0 : index
      %c0_11 = arith.constant 0 : index
      %15 = vector.load %arg8[%c0_10, %c0_11] : memref<8x1xf32, #tpu.memory_space<vmem>>, vector<8x1xf32>
      %cst_12 = arith.constant dense<0.000000e+00> : vector<32x1xf32>
      %16 = tpu.matmul %12, %15, %cst_12 {dimension_numbers = #tpu.dot_dimension_numbers<[1], [0], [0], [1], [0, 0, 1, 1], [], []>} : vector<32x8xf32>, vector<8x1xf32>, vector<32x1xf32> -> vector<32x1xf32>
      %c0_13 = arith.constant 0 : index
      %c0_14 = arith.constant 0 : index
      %17 = vector.load %arg6[%c0_13, %c0_14] : memref<4x32xf32, #tpu.memory_space<vmem>>, vector<4x32xf32>
      %cst_15 = arith.constant dense<0.000000e+00> : vector<4x1xf32>
      %18 = tpu.matmul %17, %14, %cst_15 {dimension_numbers = #tpu.dot_dimension_numbers<[1], [0], [0], [1], [0, 0, 1, 1], [], []>} : vector<4x32xf32>, vector<32x1xf32>, vector<4x1xf32> -> vector<4x1xf32>
      %c0_16 = arith.constant 0 : index
      %c0_17 = arith.constant 0 : index
      %19 = vector.load %arg6[%c0_16, %c0_17] : memref<4x32xf32, #tpu.memory_space<vmem>>, vector<4x32xf32>
      %cst_18 = arith.constant dense<0.000000e+00> : vector<4x1xf32>
      %20 = tpu.matmul %19, %16, %cst_18 {dimension_numbers = #tpu.dot_dimension_numbers<[1], [0], [0], [1], [0, 0, 1, 1], [], []>} : vector<4x32xf32>, vector<32x1xf32>, vector<4x1xf32> -> vector<4x1xf32>
      %cst_19 = arith.constant 7.812500e-03 : f32
      %21 = vector.broadcast %cst_19 : f32 to vector<4x1xf32>
      %22 = arith.mulf %18, %21 : vector<4x1xf32>
      %cst_20 = arith.constant 7.812500e-03 : f32
      %23 = vector.broadcast %cst_20 : f32 to vector<4x1xf32>
      %24 = arith.mulf %20, %23 : vector<4x1xf32>
      %25 = arith.mulf %22, %22 : vector<4x1xf32>
      %26 = arith.subf %24, %25 : vector<4x1xf32>
      %cst_21 = arith.constant 0.000000e+00 : f32
      %27 = vector.broadcast %cst_21 : f32 to vector<4x1xf32>
      %28 = arith.maximumf %26, %27 : vector<4x1xf32>
      %c0_22 = arith.constant 0 : index
      %c0_23 = arith.constant 0 : index
      %29 = vector.load %arg9[%c0_22, %c0_23] : memref<4x1xf32, #tpu.memory_space<vmem>>, vector<4x1xf32>
      %cst_24 = arith.constant 9.99999974E-6 : f32
      %30 = vector.broadcast %cst_24 : f32 to vector<4x1xf32>
      %31 = arith.addf %28, %30 : vector<4x1xf32>
      %32 = math.rsqrt %31 : vector<4x1xf32>
      %33 = arith.mulf %29, %32 : vector<4x1xf32>
      %c0_25 = arith.constant 0 : index
      %c0_26 = arith.constant 0 : index
      %34 = vector.load %arg10[%c0_25, %c0_26] : memref<4x1xf32, #tpu.memory_space<vmem>>, vector<4x1xf32>
      %35 = arith.mulf %22, %33 : vector<4x1xf32>
      %36 = arith.subf %34, %35 : vector<4x1xf32>
      %c0_27 = arith.constant 0 : index
      %c0_28 = arith.constant 0 : index
      %37 = vector.load %arg7[%c0_27, %c0_28] : memref<32x4xf32, #tpu.memory_space<vmem>>, vector<32x4xf32>
      %cst_29 = arith.constant dense<0.000000e+00> : vector<32x1xf32>
      %38 = tpu.matmul %37, %33, %cst_29 {dimension_numbers = #tpu.dot_dimension_numbers<[1], [0], [0], [1], [0, 0, 1, 1], [], []>} : vector<32x4xf32>, vector<4x1xf32>, vector<32x1xf32> -> vector<32x1xf32>
      %c0_30 = arith.constant 0 : index
      %c0_31 = arith.constant 0 : index
      %c0_32 = arith.constant 0 : index
      %39 = vector.load %arg13[%c0_30, %c0_31, %c0_32] : memref<2x32x1xf32, #tpu.memory_space<vmem>>, vector<1x32x1xf32>
      %40 = vector.shape_cast %39 : vector<1x32x1xf32> to vector<32x1xf32>
      %41 = vector.shape_cast %38 : vector<32x1xf32> to vector<1x32x1xf32>
      tpu.vector_store %arg13[%c0_30, %c0_31, %c0_32], %41 {strides = array<i32>} : memref<2x32x1xf32, #tpu.memory_space<vmem>>, vector<1x32x1xf32>,
      %c0_33 = arith.constant 0 : index
      %c0_34 = arith.constant 0 : index
      %42 = vector.load %arg7[%c0_33, %c0_34] : memref<32x4xf32, #tpu.memory_space<vmem>>, vector<32x4xf32>
      %cst_35 = arith.constant dense<0.000000e+00> : vector<32x1xf32>
      %43 = tpu.matmul %42, %36, %cst_35 {dimension_numbers = #tpu.dot_dimension_numbers<[1], [0], [0], [1], [0, 0, 1, 1], [], []>} : vector<32x4xf32>, vector<4x1xf32>, vector<32x1xf32> -> vector<32x1xf32>
      %c1 = arith.constant 1 : index
      %c0_36 = arith.constant 0 : index
      %c0_37 = arith.constant 0 : index
      %44 = vector.load %arg13[%c1, %c0_36, %c0_37] : memref<2x32x1xf32, #tpu.memory_space<vmem>>, vector<1x32x1xf32>
      %45 = vector.shape_cast %44 : vector<1x32x1xf32> to vector<32x1xf32>
      %46 = vector.shape_cast %43 : vector<32x1xf32> to vector<1x32x1xf32>
      tpu.vector_store %arg13[%c1, %c0_36, %c0_37], %46 {strides = array<i32>} : memref<2x32x1xf32, #tpu.memory_space<vmem>>, vector<1x32x1xf32>,
    } else {
    }
    %c2_i32_2 = arith.constant 2 : i32
    %6 = arith.cmpi sge, %arg0, %c2_i32_2 : i32
    %7 = arith.extui %6 : i1 to i32
    %c0_i32_3 = arith.constant 0 : i32
    %8 = arith.cmpi ne, %7, %c0_i32_3 : i32
    scf.if %8 {
      %c2_i32_4 = arith.constant 2 : i32
      %9 = arith.subi %arg0, %c2_i32_4 : i32
      %10 = arith.index_cast %9 : i32 to index
      %c0 = arith.constant 0 : index
      %c0_5 = arith.constant 0 : index
      %11 = vector.load %arg12[%10, %c0, %c0_5] : memref<2x32x8xf32, #tpu.memory_space<vmem>>, vector<1x32x8xf32>
      %12 = vector.shape_cast %11 : vector<1x32x8xf32> to vector<32x8xf32>
      %c0_6 = arith.constant 0 : index
      %c0_7 = arith.constant 0 : index
      %c0_8 = arith.constant 0 : index
      %13 = vector.load %arg13[%c0_6, %c0_7, %c0_8] : memref<2x32x1xf32, #tpu.memory_space<vmem>>, vector<1x32x1xf32>
      %14 = vector.shape_cast %13 : vector<1x32x1xf32> to vector<32x1xf32>
      %15 = vector.broadcast %14 : vector<32x1xf32> to vector<32x8xf32>
      %16 = arith.mulf %12, %15 : vector<32x8xf32>
      %c1 = arith.constant 1 : index
      %c0_9 = arith.constant 0 : index
      %c0_10 = arith.constant 0 : index
      %17 = vector.load %arg13[%c1, %c0_9, %c0_10] : memref<2x32x1xf32, #tpu.memory_space<vmem>>, vector<1x32x1xf32>
      %18 = vector.shape_cast %17 : vector<1x32x1xf32> to vector<32x1xf32>
      %19 = vector.broadcast %18 : vector<32x1xf32> to vector<32x8xf32>
      %20 = arith.addf %16, %19 : vector<32x8xf32>
      %cst = arith.constant 0.000000e+00 : f32
      %21 = vector.broadcast %cst : f32 to vector<32x8xf32>
      %22 = arith.maximumf %20, %21 : vector<32x8xf32>
      %c0_11 = arith.constant 0 : index
      %c0_12 = arith.constant 0 : index
      %23 = vector.load %arg4[%c0_11, %c0_12] : memref<8x16xf32, #tpu.memory_space<vmem>>, vector<8x16xf32>
      %cst_13 = arith.constant dense<0.000000e+00> : vector<32x16xf32>
      %24 = tpu.matmul %22, %23, %cst_13 {dimension_numbers = #tpu.dot_dimension_numbers<[1], [0], [0], [1], [0, 0, 1, 1], [], []>} : vector<32x8xf32>, vector<8x16xf32>, vector<32x16xf32> -> vector<32x16xf32>
      %c0_14 = arith.constant 0 : index
      %c0_15 = arith.constant 0 : index
      %25 = vector.load %arg5[%c0_14, %c0_15] : memref<16x8xf32, #tpu.memory_space<vmem>>, vector<16x8xf32>
      %26 = vector.extract_strided_slice %24 {offsets = [0, 0], sizes = [8, 16], strides = [1, 1]} : vector<32x16xf32> to vector<8x16xf32>
      %cst_16 = arith.constant dense<0.000000e+00> : vector<16x16xf32>
      %27 = tpu.matmul %25, %26, %cst_16 {dimension_numbers = #tpu.dot_dimension_numbers<[1], [0], [0], [1], [0, 0, 1, 1], [], []>} : vector<16x8xf32>, vector<8x16xf32>, vector<16x16xf32> -> vector<16x16xf32>
      %c0_17 = arith.constant 0 : index
      %c0_18 = arith.constant 0 : index
      %c0_19 = arith.constant 0 : index
      %c0_20 = arith.constant 0 : index
      %28 = vector.load %arg11[%c0_17, %c0_18, %c0_19, %c0_20] : memref<1x4x16x16xf32, #tpu.memory_space<vmem>>, vector<1x1x16x16xf32>
      %29 = vector.shape_cast %28 : vector<1x1x16x16xf32> to vector<16x16xf32>
      %30 = vector.shape_cast %27 : vector<16x16xf32> to vector<1x1x16x16xf32>
      tpu.vector_store %arg11[%c0_17, %c0_18, %c0_19, %c0_20], %30 {strides = array<i32>} : memref<1x4x16x16xf32, #tpu.memory_space<vmem>>, vector<1x1x16x16xf32>,
      %c0_21 = arith.constant 0 : index
      %c0_22 = arith.constant 0 : index
      %31 = vector.load %arg5[%c0_21, %c0_22] : memref<16x8xf32, #tpu.memory_space<vmem>>, vector<16x8xf32>
      %32 = vector.extract_strided_slice %24 {offsets = [8, 0], sizes = [8, 16], strides = [1, 1]} : vector<32x16xf32> to vector<8x16xf32>
      %cst_23 = arith.constant dense<0.000000e+00> : vector<16x16xf32>
      %33 = tpu.matmul %31, %32, %cst_23 {dimension_numbers = #tpu.dot_dimension_numbers<[1], [0], [0], [1], [0, 0, 1, 1], [], []>} : vector<16x8xf32>, vector<8x16xf32>, vector<16x16xf32> -> vector<16x16xf32>
      %c0_24 = arith.constant 0 : index
      %c1_25 = arith.constant 1 : index
      %c0_26 = arith.constant 0 : index
      %c0_27 = arith.constant 0 : index
      %34 = vector.load %arg11[%c0_24, %c1_25, %c0_26, %c0_27] : memref<1x4x16x16xf32, #tpu.memory_space<vmem>>, vector<1x1x16x16xf32>
      %35 = vector.shape_cast %34 : vector<1x1x16x16xf32> to vector<16x16xf32>
      %36 = vector.shape_cast %33 : vector<16x16xf32> to vector<1x1x16x16xf32>
      tpu.vector_store %arg11[%c0_24, %c1_25, %c0_26, %c0_27], %36 {strides = array<i32>} : memref<1x4x16x16xf32, #tpu.memory_space<vmem>>, vector<1x1x16x16xf32>,
      %c0_28 = arith.constant 0 : index
      %c0_29 = arith.constant 0 : index
      %37 = vector.load %arg5[%c0_28, %c0_29] : memref<16x8xf32, #tpu.memory_space<vmem>>, vector<16x8xf32>
      %38 = vector.extract_strided_slice %24 {offsets = [16, 0], sizes = [8, 16], strides = [1, 1]} : vector<32x16xf32> to vector<8x16xf32>
      %cst_30 = arith.constant dense<0.000000e+00> : vector<16x16xf32>
      %39 = tpu.matmul %37, %38, %cst_30 {dimension_numbers = #tpu.dot_dimension_numbers<[1], [0], [0], [1], [0, 0, 1, 1], [], []>} : vector<16x8xf32>, vector<8x16xf32>, vector<16x16xf32> -> vector<16x16xf32>
      %c0_31 = arith.constant 0 : index
      %c2 = arith.constant 2 : index
      %c0_32 = arith.constant 0 : index
      %c0_33 = arith.constant 0 : index
      %40 = vector.load %arg11[%c0_31, %c2, %c0_32, %c0_33] : memref<1x4x16x16xf32, #tpu.memory_space<vmem>>, vector<1x1x16x16xf32>
      %41 = vector.shape_cast %40 : vector<1x1x16x16xf32> to vector<16x16xf32>
      %42 = vector.shape_cast %39 : vector<16x16xf32> to vector<1x1x16x16xf32>
      tpu.vector_store %arg11[%c0_31, %c2, %c0_32, %c0_33], %42 {strides = array<i32>} : memref<1x4x16x16xf32, #tpu.memory_space<vmem>>, vector<1x1x16x16xf32>,
      %c0_34 = arith.constant 0 : index
      %c0_35 = arith.constant 0 : index
      %43 = vector.load %arg5[%c0_34, %c0_35] : memref<16x8xf32, #tpu.memory_space<vmem>>, vector<16x8xf32>
      %44 = vector.extract_strided_slice %24 {offsets = [24, 0], sizes = [8, 16], strides = [1, 1]} : vector<32x16xf32> to vector<8x16xf32>
      %cst_36 = arith.constant dense<0.000000e+00> : vector<16x16xf32>
      %45 = tpu.matmul %43, %44, %cst_36 {dimension_numbers = #tpu.dot_dimension_numbers<[1], [0], [0], [1], [0, 0, 1, 1], [], []>} : vector<16x8xf32>, vector<8x16xf32>, vector<16x16xf32> -> vector<16x16xf32>
      %c0_37 = arith.constant 0 : index
      %c3 = arith.constant 3 : index
      %c0_38 = arith.constant 0 : index
      %c0_39 = arith.constant 0 : index
      %46 = vector.load %arg11[%c0_37, %c3, %c0_38, %c0_39] : memref<1x4x16x16xf32, #tpu.memory_space<vmem>>, vector<1x1x16x16xf32>
      %47 = vector.shape_cast %46 : vector<1x1x16x16xf32> to vector<16x16xf32>
      %48 = vector.shape_cast %45 : vector<16x16xf32> to vector<1x1x16x16xf32>
      tpu.vector_store %arg11[%c0_37, %c3, %c0_38, %c0_39], %48 {strides = array<i32>} : memref<1x4x16x16xf32, #tpu.memory_space<vmem>>, vector<1x1x16x16xf32>,
    } else {
    }
    return
  }
  func.func @transform_0(%arg0: i32) -> (i32, i32, i32) {
    %c1_i32 = arith.constant 1 : i32
    %0 = arith.minsi %arg0, %c1_i32 : i32
    %c0_i32 = arith.constant 0 : i32
    %c0_i32_0 = arith.constant 0 : i32
    %c0_i32_1 = arith.constant 0 : i32
    return %0, %c0_i32, %c0_i32_0 : i32, i32, i32
  }
  func.func @transform_1(%arg0: i32) -> (i32, i32, i32) {
    %c0_i32 = arith.constant 0 : i32
    %c0_i32_0 = arith.constant 0 : i32
    %c0_i32_1 = arith.constant 0 : i32
    %c0_i32_2 = arith.constant 0 : i32
    return %c0_i32, %c0_i32_0, %c0_i32_1 : i32, i32, i32
  }
  func.func @transform_2(%arg0: i32) -> (i32, i32, i32) {
    %c0_i32 = arith.constant 0 : i32
    %c0_i32_0 = arith.constant 0 : i32
    %c0_i32_1 = arith.constant 0 : i32
    %c0_i32_2 = arith.constant 0 : i32
    return %c0_i32, %c0_i32_0, %c0_i32_1 : i32, i32, i32
  }
  func.func @transform_3(%arg0: i32) -> (i32, i32) {
    %c0_i32 = arith.constant 0 : i32
    %c0_i32_0 = arith.constant 0 : i32
    %c0_i32_1 = arith.constant 0 : i32
    return %c0_i32, %c0_i32_0 : i32, i32
  }
  func.func @transform_4(%arg0: i32) -> (i32, i32) {
    %c0_i32 = arith.constant 0 : i32
    %c0_i32_0 = arith.constant 0 : i32
    %c0_i32_1 = arith.constant 0 : i32
    return %c0_i32, %c0_i32_0 : i32, i32
  }
  func.func @transform_5(%arg0: i32) -> (i32, i32) {
    %c0_i32 = arith.constant 0 : i32
    %c0_i32_0 = arith.constant 0 : i32
    %c0_i32_1 = arith.constant 0 : i32
    return %c0_i32, %c0_i32_0 : i32, i32
  }
  func.func @transform_6(%arg0: i32) -> (i32, i32) {
    %c0_i32 = arith.constant 0 : i32
    %c0_i32_0 = arith.constant 0 : i32
    %c0_i32_1 = arith.constant 0 : i32
    return %c0_i32, %c0_i32_0 : i32, i32
  }
  func.func @transform_7(%arg0: i32) -> (i32, i32) {
    %c0_i32 = arith.constant 0 : i32
    %c0_i32_0 = arith.constant 0 : i32
    %c0_i32_1 = arith.constant 0 : i32
    return %c0_i32, %c0_i32_0 : i32, i32
  }
  func.func @transform_8(%arg0: i32) -> (i32, i32) {
    %c0_i32 = arith.constant 0 : i32
    %c0_i32_0 = arith.constant 0 : i32
    %c0_i32_1 = arith.constant 0 : i32
    return %c0_i32, %c0_i32_0 : i32, i32
  }
  func.func @transform_9(%arg0: i32) -> (i32, i32) {
    %c0_i32 = arith.constant 0 : i32
    %c0_i32_0 = arith.constant 0 : i32
    %c0_i32_1 = arith.constant 0 : i32
    return %c0_i32, %c0_i32_0 : i32, i32
  }
  func.func @transform_10(%arg0: i32) -> (i32, i32, i32, i32) {
    %c2_i32 = arith.constant 2 : i32
    %0 = arith.subi %arg0, %c2_i32 : i32
    %c0_i32 = arith.constant 0 : i32
    %1 = arith.maxsi %0, %c0_i32 : i32
    %c0_i32_0 = arith.constant 0 : i32
    %c0_i32_1 = arith.constant 0 : i32
    %c0_i32_2 = arith.constant 0 : i32
    %c0_i32_3 = arith.constant 0 : i32
    return %1, %c0_i32_0, %c0_i32_1, %c0_i32_2 : i32, i32, i32, i32
  }
}

</mosaic_0001>

<llo_original>
// kernel: forward.1
$region0: #{forward.1}
  #allocation0 [shape = 'u32[]', space=smem, size = 0x4, offset = 0x4, fixed_abs, tag = 'smem constant byte address 0x4 - core index']
  #allocation1 [shape = 'u32[144,128]{1,0:T(1,128)}', space=vmem, size = 0x12000, scoped, tag = 'internal scratch']
  #allocation2 [shape = 'f32[2,32,8]{2,1,0:T(8,128)}', space=vmem, size = 0x8000, scoped, tag = 'scratch operand']
  #allocation3 [shape = 'f32[2,32,1]{2,1,0:T(8,128)}', space=vmem, size = 0x8000, scoped, tag = 'scratch operand']
  %s0 = inlined_call_operand.hbm [shape: f32[2,64,16], index: 0, kind: input, shape index: {}]
  %s1 = inlined_call_operand.hbm [shape: f32[3,16,8], index: 1, kind: input, shape index: {}]
  %s2 = inlined_call_operand.hbm [shape: f32[3,32,64], index: 2, kind: input, shape index: {}]
  %s3 = inlined_call_operand.hbm [shape: f32[8,16], index: 3, kind: input, shape index: {}]
  %s4 = inlined_call_operand.hbm [shape: f32[16,8], index: 4, kind: input, shape index: {}]
  %s5 = inlined_call_operand.hbm [shape: f32[4,32], index: 5, kind: input, shape index: {}]
  %s6 = inlined_call_operand.vmem [shape: f32[32,4], index: 6, kind: input, shape index: {}]
  %s7 = inlined_call_operand.vmem [shape: f32[8,1], index: 7, kind: input, shape index: {}]
  %s8 = inlined_call_operand.vmem [shape: f32[4,1], index: 8, kind: input, shape index: {}]
  %s9 = inlined_call_operand.vmem [shape: f32[4,1], index: 9, kind: input, shape index: {}]
  %s10 = inlined_call_operand.hbm [shape: f32[2,4,16,16], index: 10, kind: output, shape index: {}]
  %s11 = sld [smem:[#allocation0]]
  $region109: #{forward.1} parent=0
    _
  %s13 = ssub.s32 1, %s11
  %s14 = scalar_select 0, %s13, %s11
  $region1: #{forward.1} parent=0
    #allocation4 [shape = 'u8[65536]{0}', space=vmem, size = 0x10000, scoped, tag = 'input window, operand 0']
    #allocation5 [shape = 's32[2]{0}', space=sflag, size = 0x8, scoped, tag = 'scoped memory for forward.1']
    #allocation6 [shape = 's32[2]{0}', space=sflag, size = 0x8, scoped, tag = 'scoped memory for forward.1']
    #allocation7 [shape = 'u8[24576]{0}', space=vmem, size = 0x6000, scoped, tag = 'input window, operand 1, single buffered']
    #allocation8 [shape = 's32[1]{0}', space=sflag, size = 0x4, scoped, tag = 'scoped memory for forward.1']
    #allocation9 [shape = 'u8[49152]{0}', space=vmem, size = 0xc000, scoped, tag = 'input window, operand 2, single buffered']
    #allocation10 [shape = 'u8[4096]{0}', space=vmem, size = 0x1000, scoped, tag = 'input window, operand 3, single buffered']
    #allocation11 [shape = 's32[1]{0}', space=sflag, size = 0x4, scoped, tag = 'scoped memory for forward.1']
    #allocation12 [shape = 'u8[8192]{0}', space=vmem, size = 0x2000, scoped, tag = 'input window, operand 4, single buffered']
    #allocation13 [shape = 'u8[2048]{0}', space=vmem, size = 0x800, scoped, tag = 'input window, operand 5, single buffered']
    #allocation14 [shape = 's32[1]{0}', space=sflag, size = 0x4, scoped, tag = 'scoped memory for forward.1']
    #allocation15 [shape = 'u8[65536]{0}', space=vmem, size = 0x10000, scoped, tag = 'output window, operand 0']
    %15 = vsyncpa [#allocation5], 0
    %s16 = scalar_lea.sflag [#allocation5], 1
    %17 = vsyncpa %s16, 0
    %18 = vsyncpa [#allocation8], 0
    %19 = vsyncpa [#allocation11], 0
    %20 = vsyncpa [#allocation14], 0
    %21 = vsyncpa [#allocation6], 0
    %s22 = scalar_lea.sflag [#allocation6], 1
    %23 = vsyncpa %s22, 0
    loop: start=0, step=1, limit=6
    $region2: #{forward.1} parent=1 // loop_pre_header
      _
    $region3: #{forward.1} parent=1 // loop_header
      %s25 = sphi 0, %s29
      %p26 = scmp.ge.s32.totalorder %s25, 6
      %s39 = sphi 0, %s41
      %s42 = sphi 0, %s39
      %s43 = sphi 0, %s42
      %s59 = sphi 0, %s43
      %s63 = sphi 0, %s63
      %s65 = sphi 0, %s63
      %s66 = sphi 0, %s65
      %s80 = sphi 0, %s66
      %s84 = sphi 0, %s84
      %s86 = sphi 0, %s84
      %s87 = sphi 0, %s86
      %s101 = sphi 0, %s87
      %s105 = sphi 0, %s105
      %s107 = sphi 0, %s105
      %s108 = sphi 0, %s107
      %s122 = sphi 0, %s108
      %s126 = sphi 0, %s126
      %s128 = sphi 0, %s126
      %s129 = sphi 0, %s128
      %s143 = sphi 0, %s129
      %s147 = sphi 0, %s147
      %s149 = sphi 0, %s147
      %s150 = sphi 0, %s149
      %s164 = sphi 0, %s150
      %s168 = sphi 0, %s168
      %s170 = sphi 0, %s168
      %s171 = sphi 0, %s170
      %s185 = sphi 0, %s171
      %s189 = sphi 0, %s189
      %s191 = sphi 0, %s189
      %s192 = sphi 0, %s191
      %s206 = sphi 0, %s192
      %s210 = sphi 0, %s210
      %s212 = sphi 0, %s210
      %s213 = sphi 0, %s212
      %s227 = sphi 0, %s213
      %s231 = sphi 0, %s231
      %s233 = sphi 0, %s231
      %s234 = sphi 0, %s233
      %s248 = sphi 0, %s234
      %s260 = sphi 0, %s262
      %s263 = sphi 0, %s260
      %s264 = sphi 0, %s263
      %s280 = sphi 0, %s264
    $region4: #{forward.1} parent=1 // loop_header_branch
      %28 = sbr.rel (%p26) target = $region8
    $region5: #{forward.1} parent=1 // loop_body
      %s30 = ssub.s32 %s25, 1
      %s31 = ssub.s32 %s25, 2
      %s32 = sadd.s32 %s25, 1
      %p33 = scmp.lt.s32.totalorder %s25, 1
      %s34 = scalar_select %p33, %s25, 1
      %p35 = scmp.lt.s32.totalorder %s32, 1
      %s36 = scalar_select %p35, %s32, 1
      %s37 = ssub.s32 %s34, %s36
      %p38 = scmp.eq.s32.totalorder %s37, 0
      %s40 = sadd.s32 %s39, 1
      %s41 = scalar_select %p38, %s39, %s40
      %p44 = pneg %p38
      %p45 = scmp.eq.s32.totalorder %s25, 3
      %p46 = por %p44, %p45
      %p47 = scmp.ne.s32.totalorder %s39, %s42
      %p48 = scmp.eq.s32.totalorder %s25, 0
      %p49 = por %p47, %p48
      %p50 = scmp.ne.s32.totalorder %s39, %s42
      %p51 = scmp.eq.s32.totalorder %s30, 3
      %p52 = por %p50, %p51
      %p53 = scmp.ne.s32.totalorder %s42, %s43
      %p54 = scmp.eq.s32.totalorder %s30, 0
      %p55 = por %p53, %p54
      %p56 = scmp.ne.s32.totalorder %s42, %s43
      %p57 = scmp.eq.s32.totalorder %s31, 3
      %p58 = por %p56, %p57
      %p60 = scmp.ne.s32.totalorder %s43, %s59
      %p61 = scmp.eq.s32.totalorder %s31, 0
      %p62 = por %p60, %p61
      %s64 = sadd.s32 %s63, 1
      %p67 = scmp.eq.s32.totalorder %s25, 3
      %p68 = scmp.ne.s32.totalorder %s63, %s65
      %p69 = scmp.eq.s32.totalorder %s25, 0
      %p70 = por %p68, %p69
      %p71 = scmp.ne.s32.totalorder %s63, %s65
      %p72 = scmp.eq.s32.totalorder %s30, 3
      %p73 = por %p71, %p72
      %p74 = scmp.ne.s32.totalorder %s65, %s66
      %p75 = scmp.eq.s32.totalorder %s30, 0
      %p76 = por %p74, %p75
      %p77 = scmp.ne.s32.totalorder %s65, %s66
      %p78 = scmp.eq.s32.totalorder %s31, 3
      %p79 = por %p77, %p78
      %p81 = scmp.ne.s32.totalorder %s66, %s80
      %p82 = scmp.eq.s32.totalorder %s31, 0
      %p83 = por %p81, %p82
      %s85 = sadd.s32 %s84, 1
      %p88 = scmp.eq.s32.totalorder %s25, 3
      %p89 = scmp.ne.s32.totalorder %s84, %s86
      %p90 = scmp.eq.s32.totalorder %s25, 0
      %p91 = por %p89, %p90
      %p92 = scmp.ne.s32.totalorder %s84, %s86
      %p93 = scmp.eq.s32.totalorder %s30, 3
      %p94 = por %p92, %p93
      %p95 = scmp.ne.s32.totalorder %s86, %s87
      %p96 = scmp.eq.s32.totalorder %s30, 0
      %p97 = por %p95, %p96
      %p98 = scmp.ne.s32.totalorder %s86, %s87
      %p99 = scmp.eq.s32.totalorder %s31, 3
      %p100 = por %p98, %p99
      %p102 = scmp.ne.s32.totalorder %s87, %s101
      %p103 = scmp.eq.s32.totalorder %s31, 0
      %p104 = por %p102, %p103
      %s106 = sadd.s32 %s105, 1
      %p109 = scmp.eq.s32.totalorder %s25, 3
      %p110 = scmp.ne.s32.totalorder %s105, %s107
      %p111 = scmp.eq.s32.totalorder %s25, 0
      %p112 = por %p110, %p111
      %p113 = scmp.ne.s32.totalorder %s105, %s107
      %p114 = scmp.eq.s32.totalorder %s30, 3
      %p115 = por %p113, %p114
      %p116 = scmp.ne.s32.totalorder %s107, %s108
      %p117 = scmp.eq.s32.totalorder %s30, 0
      %p118 = por %p116, %p117
      %p119 = scmp.ne.s32.totalorder %s107, %s108
      %p120 = scmp.eq.s32.totalorder %s31, 3
      %p121 = por %p119, %p120
      %p123 = scmp.ne.s32.totalorder %s108, %s122
      %p124 = scmp.eq.s32.totalorder %s31, 0
      %p125 = por %p123, %p124
      %s127 = sadd.s32 %s126, 1
      %p130 = scmp.eq.s32.totalorder %s25, 3
      %p131 = scmp.ne.s32.totalorder %s126, %s128
      %p132 = scmp.eq.s32.totalorder %s25, 0
      %p133 = por %p131, %p132
      %p134 = scmp.ne.s32.totalorder %s126, %s128
      %p135 = scmp.eq.s32.totalorder %s30, 3
      %p136 = por %p134, %p135
      %p137 = scmp.ne.s32.totalorder %s128, %s129
      %p138 = scmp.eq.s32.totalorder %s30, 0
      %p139 = por %p137, %p138
      %p140 = scmp.ne.s32.totalorder %s128, %s129
      %p141 = scmp.eq.s32.totalorder %s31, 3
      %p142 = por %p140, %p141
      %p144 = scmp.ne.s32.totalorder %s129, %s143
      %p145 = scmp.eq.s32.totalorder %s31, 0
      %p146 = por %p144, %p145
      %s148 = sadd.s32 %s147, 1
      %p151 = scmp.eq.s32.totalorder %s25, 3
      %p152 = scmp.ne.s32.totalorder %s147, %s149
      %p153 = scmp.eq.s32.totalorder %s25, 0
      %p154 = por %p152, %p153
      %p155 = scmp.ne.s32.totalorder %s147, %s149
      %p156 = scmp.eq.s32.totalorder %s30, 3
      %p157 = por %p155, %p156
      %p158 = scmp.ne.s32.totalorder %s149, %s150
      %p159 = scmp.eq.s32.totalorder %s30, 0
      %p160 = por %p158, %p159
      %p161 = scmp.ne.s32.totalorder %s149, %s150
      %p162 = scmp.eq.s32.totalorder %s31, 3
      %p163 = por %p161, %p162
      %p165 = scmp.ne.s32.totalorder %s150, %s164
      %p166 = scmp.eq.s32.totalorder %s31, 0
      %p167 = por %p165, %p166
      %s169 = sadd.s32 %s168, 1
      %p172 = scmp.eq.s32.totalorder %s25, 3
      %p173 = scmp.ne.s32.totalorder %s168, %s170
      %p174 = scmp.eq.s32.totalorder %s25, 0
      %p175 = por %p173, %p174
      %p176 = scmp.ne.s32.totalorder %s168, %s170
      %p177 = scmp.eq.s32.totalorder %s30, 3
      %p178 = por %p176, %p177
      %p179 = scmp.ne.s32.totalorder %s170, %s171
      %p180 = scmp.eq.s32.totalorder %s30, 0
      %p181 = por %p179, %p180
      %p182 = scmp.ne.s32.totalorder %s170, %s171
      %p183 = scmp.eq.s32.totalorder %s31, 3
      %p184 = por %p182, %p183
      %p186 = scmp.ne.s32.totalorder %s171, %s185
      %p187 = scmp.eq.s32.totalorder %s31, 0
      %p188 = por %p186, %p187
      %s190 = sadd.s32 %s189, 1
      %p193 = scmp.eq.s32.totalorder %s25, 3
      %p194 = scmp.ne.s32.totalorder %s189, %s191
      %p195 = scmp.eq.s32.totalorder %s25, 0
      %p196 = por %p194, %p195
      %p197 = scmp.ne.s32.totalorder %s189, %s191
      %p198 = scmp.eq.s32.totalorder %s30, 3
      %p199 = por %p197, %p198
      %p200 = scmp.ne.s32.totalorder %s191, %s192
      %p201 = scmp.eq.s32.totalorder %s30, 0
      %p202 = por %p200, %p201
      %p203 = scmp.ne.s32.totalorder %s191, %s192
      %p204 = scmp.eq.s32.totalorder %s31, 3
      %p205 = por %p203, %p204
      %p207 = scmp.ne.s32.totalorder %s192, %s206
      %p208 = scmp.eq.s32.totalorder %s31, 0
      %p209 = por %p207, %p208
      %s211 = sadd.s32 %s210, 1
      %p214 = scmp.eq.s32.totalorder %s25, 3
      %p215 = scmp.ne.s32.totalorder %s210, %s212
      %p216 = scmp.eq.s32.totalorder %s25, 0
      %p217 = por %p215, %p216
      %p218 = scmp.ne.s32.totalorder %s210, %s212
      %p219 = scmp.eq.s32.totalorder %s30, 3
      %p220 = por %p218, %p219
      %p221 = scmp.ne.s32.totalorder %s212, %s213
      %p222 = scmp.eq.s32.totalorder %s30, 0
      %p223 = por %p221, %p222
      %p224 = scmp.ne.s32.totalorder %s212, %s213
      %p225 = scmp.eq.s32.totalorder %s31, 3
      %p226 = por %p224, %p225
      %p228 = scmp.ne.s32.totalorder %s213, %s227
      %p229 = scmp.eq.s32.totalorder %s31, 0
      %p230 = por %p228, %p229
      %s232 = sadd.s32 %s231, 1
      %p235 = scmp.eq.s32.totalorder %s25, 3
      %p236 = scmp.ne.s32.totalorder %s231, %s233
      %p237 = scmp.eq.s32.totalorder %s25, 0
      %p238 = por %p236, %p237
      %p239 = scmp.ne.s32.totalorder %s231, %s233
      %p240 = scmp.eq.s32.totalorder %s30, 3
      %p241 = por %p239, %p240
      %p242 = scmp.ne.s32.totalorder %s233, %s234
      %p243 = scmp.eq.s32.totalorder %s30, 0
      %p244 = por %p242, %p243
      %p245 = scmp.ne.s32.totalorder %s233, %s234
      %p246 = scmp.eq.s32.totalorder %s31, 3
      %p247 = por %p245, %p246
      %p249 = scmp.ne.s32.totalorder %s234, %s248
      %p250 = scmp.eq.s32.totalorder %s31, 0
      %p251 = por %p249, %p250
      %s252 = ssub.s32 %s25, 2
      %p253 = scmp.gt.s32.totalorder %s252, 0
      %s254 = scalar_select %p253, %s252, 0
      %s255 = ssub.s32 %s32, 2
      %p256 = scmp.gt.s32.totalorder %s255, 0
      %s257 = scalar_select %p256, %s255, 0
      %s258 = ssub.s32 %s254, %s257
      %p259 = scmp.eq.s32.totalorder %s258, 0
      %s261 = sadd.s32 %s260, 1
      %s262 = scalar_select %p259, %s260, %s261
      %p265 = pneg %p259
      %p266 = scmp.eq.s32.totalorder %s25, 3
      %p267 = por %p265, %p266
      %p268 = scmp.ne.s32.totalorder %s260, %s263
      %p269 = scmp.eq.s32.totalorder %s25, 0
      %p270 = por %p268, %p269
      %p271 = scmp.ne.s32.totalorder %s260, %s263
      %p272 = scmp.eq.s32.totalorder %s30, 3
      %p273 = por %p271, %p272
      %p274 = scmp.ne.s32.totalorder %s263, %s264
      %p275 = scmp.eq.s32.totalorder %s30, 0
      %p276 = por %p274, %p275
      %p277 = scmp.ne.s32.totalorder %s263, %s264
      %p278 = scmp.eq.s32.totalorder %s31, 3
      %p279 = por %p277, %p278
      %p281 = scmp.ne.s32.totalorder %s264, %s280
      %p282 = scmp.eq.s32.totalorder %s31, 0
      %p283 = por %p281, %p282
      %p284 = scmp.le.s32.totalorder 1, %s25
      %p285 = scmp.lt.s32.totalorder %s25, 5
      %p286 = pnand %p284, %p285
      %p287 = pneg %p286
      // Predicated region
      $region9: #{forward.1} parent=5 // pred_check
        _
      $region10: #{forward.1} parent=5 // pred_check_branch
        %289 = sbr.rel (%p286) target = $region12
      $region11: #{forward.1} parent=5 // pred_region
        %s290 = ssub.s32 %s25, 1
        // Predicated region
        $region13: #{forward.1} parent=11 // pred_check
          %p291 = pneg %p76
        $region14: #{forward.1} parent=11 // pred_check_branch
          %293 = sbr.rel (%p291) target = $region16
        $region15: #{forward.1} parent=11 // pred_region
          %s295 = ssub.s32 768, 768
          %296 = vsyncadd [#allocation8], %s295
          %s297 = sshll.u32 [#allocation7], 4
          %s298 = int_to_ptr.vmem [resolvable:$true] %s297
          %303 = dma.hbm_to_vmem [thread:$0]  %s1, 768, %s298, [#allocation8], 128, 128, 8
        $region16: #{forward.1} parent=11 // pred_fallthru
          _
        // Predicated region
        $region17: #{forward.1} parent=11 // pred_check
          %p304 = pneg %p97
        $region18: #{forward.1} parent=11 // pred_check_branch
          %306 = sbr.rel (%p304) target = $region20
        $region19: #{forward.1} parent=11 // pred_region
          %s308 = ssub.s32 1536, 1536
          %309 = vsyncadd [#allocation8], %s308
          %s310 = sshll.u32 [#allocation9], 4
          %s311 = int_to_ptr.vmem [resolvable:$true] %s310
          %316 = dma.hbm_to_vmem [thread:$0]  %s2, 1536, %s311, [#allocation8], 128, 128, 8
        $region20: #{forward.1} parent=11 // pred_fallthru
          _
        // Predicated region
        $region21: #{forward.1} parent=11 // pred_check
          %p317 = pneg %p118
        $region22: #{forward.1} parent=11 // pred_check_branch
          %319 = sbr.rel (%p317) target = $region24
        $region23: #{forward.1} parent=11 // pred_region
          %s321 = ssub.s32 128, 128
          %322 = vsyncadd [#allocation11], %s321
          %s324 = sshll.u32 [#allocation10], 4
          %s325 = int_to_ptr.vmem [resolvable:$true] %s324
          %327 = dma.hbm_to_vmem [thread:$0]  %s3, 128, %s325, [#allocation11]
        $region24: #{forward.1} parent=11 // pred_fallthru
          _
        // Predicated region
        $region25: #{forward.1} parent=11 // pred_check
          %p328 = pneg %p139
        $region26: #{forward.1} parent=11 // pred_check_branch
          %330 = sbr.rel (%p328) target = $region28
        $region27: #{forward.1} parent=11 // pred_region
          %s332 = ssub.s32 256, 256
          %333 = vsyncadd [#allocation11], %s332
          %s334 = sshll.u32 [#allocation12], 4
          %s335 = int_to_ptr.vmem [resolvable:$true] %s334
          %340 = dma.hbm_to_vmem [thread:$0]  %s4, 256, %s335, [#allocation11], 128, 128, 8
        $region28: #{forward.1} parent=11 // pred_fallthru
          _
        // Predicated region
        $region29: #{forward.1} parent=11 // pred_check
          %p341 = pneg %p160
        $region30: #{forward.1} parent=11 // pred_check_branch
          %343 = sbr.rel (%p341) target = $region32
        $region31: #{forward.1} parent=11 // pred_region
          %s345 = ssub.s32 64, 64
          %346 = vsyncadd [#allocation14], %s345
          %s348 = sshll.u32 [#allocation13], 4
          %s349 = int_to_ptr.vmem [resolvable:$true] %s348
          %351 = dma.hbm_to_vmem [thread:$0]  %s5, 64, %s349, [#allocation14]
        $region32: #{forward.1} parent=11 // pred_fallthru
          _
        // Predicated region
        $region33: #{forward.1} parent=11 // pred_check
          %p352 = pneg %p181
        $region34: #{forward.1} parent=11 // pred_check_branch
          %354 = sbr.rel (%p352) target = $region36
        $region35: #{forward.1} parent=11 // pred_region
          _
        $region36: #{forward.1} parent=11 // pred_fallthru
          _
        // Predicated region
        $region37: #{forward.1} parent=11 // pred_check
          %p355 = pneg %p202
        $region38: #{forward.1} parent=11 // pred_check_branch
          %357 = sbr.rel (%p355) target = $region40
        $region39: #{forward.1} parent=11 // pred_region
          _
        $region40: #{forward.1} parent=11 // pred_fallthru
          _
        // Predicated region
        $region41: #{forward.1} parent=11 // pred_check
          %p358 = pneg %p223
        $region42: #{forward.1} parent=11 // pred_check_branch
          %360 = sbr.rel (%p358) target = $region44
        $region43: #{forward.1} parent=11 // pred_region
          _
        $region44: #{forward.1} parent=11 // pred_fallthru
          _
        // Predicated region
        $region45: #{forward.1} parent=11 // pred_check
          %p361 = pneg %p244
        $region46: #{forward.1} parent=11 // pred_check_branch
          %363 = sbr.rel (%p361) target = $region48
        $region47: #{forward.1} parent=11 // pred_region
          _
        $region48: #{forward.1} parent=11 // pred_fallthru
          _
      $region12: #{forward.1} parent=5 // pred_fallthru
        _
      %p364 = scmp.lt.s32.totalorder %s25, 4
      // Predicated region
      $region49: #{forward.1} parent=5 // pred_check
        %p365 = pneg %p364
      $region50: #{forward.1} parent=5 // pred_check_branch
        %367 = sbr.rel (%p365) target = $region52
      $region51: #{forward.1} parent=5 // pred_region
        // Predicated region
        $region53: #{forward.1} parent=51 // pred_check
          %p368 = pneg %p49
        $region54: #{forward.1} parent=51 // pred_check_branch
          %370 = sbr.rel (%p368) target = $region56
        $region55: #{forward.1} parent=51 // pred_region
          %s371 = sand.u32 %s39, 1
          %s372 = scalar_lea.sflag [#allocation5], %s371
          %s373 = sand.u32 %s39, 1
          %s374 = smul.addr %s373, 64
          %s375 = scalar_lea.vmem [#allocation4], %s374
          %p376 = scmp.lt.s32.totalorder %s25, 1
          %s377 = scalar_select %p376, %s25, 1
          %s379 = ssub.s32 1024, 1024
          %380 = vsyncadd %s372, %s379
          %s381 = smul.addr %s377, 8
          %s382 = smul.addr %s381, 128
          %s383 = scalar_lea.hbm %s0, %s382
          %s384 = sshll.u32 %s375, 4
          %s385 = int_to_ptr.vmem [resolvable:$true] %s384
          %390 = dma.hbm_to_vmem [thread:$0]  %s383, 1024, %s385, %s372, 128, 128, 8
        $region56: #{forward.1} parent=51 // pred_fallthru
          _
      $region52: #{forward.1} parent=5 // pred_fallthru
        _
      %p391 = scmp.le.s32.totalorder 1, %s25
      %p392 = scmp.lt.s32.totalorder %s25, 5
      %p393 = pnand %p391, %p392
      %p394 = pneg %p393
      // Predicated region
      $region57: #{forward.1} parent=5 // pred_check
        _
      $region58: #{forward.1} parent=5 // pred_check_branch
        %396 = sbr.rel (%p393) target = $region60
      $region59: #{forward.1} parent=5 // pred_region
        %s397 = ssub.s32 %s25, 1
        %s398 = sand.u32 %s42, 1
        %s399 = scalar_lea.sflag [#allocation5], %s398
        %s400 = sand.u32 %s42, 1
        %s401 = smul.addr %s400, 64
        %s402 = scalar_lea.vmem [#allocation4], %s401
        // Predicated region
        $region61: #{forward.1} parent=59 // pred_check
          %p403 = pneg %p55
        $region62: #{forward.1} parent=59 // pred_check_branch
          %405 = sbr.rel (%p403) target = $region64
        $region63: #{forward.1} parent=59 // pred_region
          %406 = dma.done %s399, 1024
        $region64: #{forward.1} parent=59 // pred_fallthru
          _
        // Predicated region
        $region65: #{forward.1} parent=59 // pred_check
          %p407 = pneg %p76
        $region66: #{forward.1} parent=59 // pred_check_branch
          %409 = sbr.rel (%p407) target = $region68
        $region67: #{forward.1} parent=59 // pred_region
          %410 = dma.done [#allocation8], 768
        $region68: #{forward.1} parent=59 // pred_fallthru
          _
        // Predicated region
        $region69: #{forward.1} parent=59 // pred_check
          %p411 = pneg %p97
        $region70: #{forward.1} parent=59 // pred_check_branch
          %413 = sbr.rel (%p411) target = $region72
        $region71: #{forward.1} parent=59 // pred_region
          %414 = dma.done [#allocation8], 1536
        $region72: #{forward.1} parent=59 // pred_fallthru
          _
        // Predicated region
        $region73: #{forward.1} parent=59 // pred_check
          %p415 = pneg %p118
        $region74: #{forward.1} parent=59 // pred_check_branch
          %417 = sbr.rel (%p415) target = $region76
        $region75: #{forward.1} parent=59 // pred_region
          %418 = dma.done [#allocation11], 128
        $region76: #{forward.1} parent=59 // pred_fallthru
          _
        // Predicated region
        $region77: #{forward.1} parent=59 // pred_check
          %p419 = pneg %p139
        $region78: #{forward.1} parent=59 // pred_check_branch
          %421 = sbr.rel (%p419) target = $region80
        $region79: #{forward.1} parent=59 // pred_region
          %422 = dma.done [#allocation11], 256
        $region80: #{forward.1} parent=59 // pred_fallthru
          _
        // Predicated region
        $region81: #{forward.1} parent=59 // pred_check
          %p423 = pneg %p160
        $region82: #{forward.1} parent=59 // pred_check_branch
          %425 = sbr.rel (%p423) target = $region84
        $region83: #{forward.1} parent=59 // pred_region
          %426 = dma.done [#allocation14], 64
        $region84: #{forward.1} parent=59 // pred_fallthru
          _
        %s427 = sand.u32 %s42, 1
        %s428 = scalar_lea.sflag [#allocation5], %s427
        %s429 = sand.u32 %s42, 1
        %s430 = smul.addr %s429, 64
        %s431 = scalar_lea.vmem [#allocation4], %s430
        %p432 = pneg %p55
        %p433 = pneg %p52
        %p434 = pneg %p76
        %p435 = pneg %p73
        %p436 = pneg %p97
        %p437 = pneg %p94
        %p438 = pneg %p118
        %p439 = pneg %p115
        %p440 = pneg %p139
        %p441 = pneg %p136
        %p442 = pneg %p160
        %p443 = pneg %p157
        %p444 = pneg %p181
        %p445 = pneg %p178
        %p446 = pneg %p202
        %p447 = pneg %p199
        %p448 = pneg %p223
        %p449 = pneg %p220
        %p450 = pneg %p244
        %p451 = pneg %p241
        %p452 = pneg %p276
        %p453 = pneg %p273
        %s454 = sand.u32 %s263, 1
        %s455 = scalar_lea.sflag [#allocation6], %s454
        %s456 = sand.u32 %s263, 1
        %s457 = smul.addr %s456, 64
        %s458 = scalar_lea.vmem [#allocation15], %s457
        %p459 = scmp.lt.s32.totalorder %s30, 1
        %s460 = scalar_select %p459, %s30, 1
        %s461 = ssub.s32 %s30, 2
        %p462 = scmp.gt.s32.totalorder %s461, 0
        %s463 = scalar_select %p462, %s461, 0
        %p464 = scmp.lt.s32.totalorder %s30, 2
        // Predicated region
        $region85: #{forward.1} parent=59 // pred_check
          %p465 = pneg %p464
        $region86: #{forward.1} parent=59 // pred_check_branch
          %467 = sbr.rel (%p465) target = $region88
        $region87: #{forward.1} parent=59 // pred_region
          %v468 = vld [vmem:[%s402] sm:$0xff]
          %v469 = vld [vmem:[%s402 + $0x8] sm:$0xff]
          %v470 = vld [vmem:[%s402 + $0x10] sm:$0xff]
          %v471 = vld [vmem:[%s402 + $0x18] sm:$0xff]
          %v472 = vld [vmem:[%s402 + $0x20] sm:$0xff]
          %v473 = vld [vmem:[%s402 + $0x28] sm:$0xff]
          %v474 = vld [vmem:[%s402 + $0x30] sm:$0xff]
          %v475 = vld [vmem:[%s402 + $0x38] sm:$0xff]
          %v476 = vld [vmem:[#allocation7] sm:$0xff]
          %v477 = vld [vmem:[#allocation7 + $0x8] sm:$0xff]
          %vm478 = vcmask 130048
          %v480 = vsel %vm478, %v468, 0
          %v483 = vsel %vm478, %v469, 0
          %v486 = vsel %vm478, %v470, 0
          %v489 = vsel %vm478, %v471, 0
          %v492 = vsel %vm478, %v472, 0
          %v495 = vsel %vm478, %v473, 0
          %v498 = vsel %vm478, %v474, 0
          %v501 = vsel %vm478, %v475, 0
          %503 = vmatprep.subr.mxu0 0.0
          %504 = vmatpush1.msra.mxu0 0.0
          %505 = vmatprep.subr.mxu0 0.0
          %506 = vmatpush1.msra.mxu0 0.0
          %507 = vmatprep.subr.mxu0 0.0
          %508 = vmatpush1.msra.mxu0 0.0
          %509 = vmatprep.subr.mxu0 0.0
          %510 = vmatpush1.msra.mxu0 0.0
          %511 = vmatprep.subr.mxu0 0.0
          %512 = vmatpush1.msra.mxu0 0.0
          %513 = vmatprep.subr.mxu0 0.0
          %514 = vmatpush1.msra.mxu0 0.0
          %515 = vmatprep.subr.mxu0 0.0
          %516 = vmatpush1.msra.mxu0 0.0
          %517 = vmatprep.subr.mxu0 0.0
          %518 = vmatpush1.msra.mxu0 0.0
          %519 = vmatprep.subr.mxu0 0.0
          %520 = vmatpush1.msra.mxu0 0.0
          %521 = vmatprep.subr.mxu0 0.0
          %522 = vmatpush1.msra.mxu0 0.0
          %523 = vmatprep.subr.mxu0 0.0
          %524 = vmatpush1.msra.mxu0 0.0
          %525 = vmatprep.subr.mxu0 0.0
          %526 = vmatpush1.msra.mxu0 0.0
          %527 = vmatprep.subr.mxu0 0.0
          %528 = vmatpush1.msra.mxu0 0.0
          %529 = vmatprep.subr.mxu0 0.0
          %530 = vmatpush1.msra.mxu0 0.0
          %531 = vmatprep.subr.mxu0 0.0
          %532 = vmatpush1.msra.mxu0 %v477
          %533 = vmatprep.subr.mxu0 0.0
          %534 = vmatpush1.msra.mxu0 %v476
          %535 = vmatprep.subr.mxu0 0.0
          %536 = vmatpush2.msra.mxu0 0.0
          %537 = vmatprep.subr.mxu0 0.0
          %538 = vmatpush2.msra.mxu0 0.0
          %539 = vmatprep.subr.mxu0 0.0
          %540 = vmatpush2.msra.mxu0 0.0
          %541 = vmatprep.subr.mxu0 0.0
          %542 = vmatpush2.msra.mxu0 0.0
          %543 = vmatprep.subr.mxu0 0.0
          %544 = vmatpush2.msra.mxu0 0.0
          %545 = vmatprep.subr.mxu0 0.0
          %546 = vmatpush2.msra.mxu0 0.0
          %547 = vmatprep.subr.mxu0 0.0
          %548 = vmatpush2.msra.mxu0 0.0
          %549 = vmatprep.subr.mxu0 0.0
          %550 = vmatpush2.msra.mxu0 0.0
          %551 = vmatprep.subr.mxu0 0.0
          %552 = vmatpush2.msra.mxu0 0.0
          %553 = vmatprep.subr.mxu0 0.0
          %554 = vmatpush2.msra.mxu0 0.0
          %555 = vmatprep.subr.mxu0 0.0
          %556 = vmatpush2.msra.mxu0 0.0
          %557 = vmatprep.subr.mxu0 0.0
          %558 = vmatpush2.msra.mxu0 0.0
          %559 = vmatprep.subr.mxu0 0.0
          %560 = vmatpush2.msra.mxu0 0.0
          %561 = vmatprep.subr.mxu0 0.0
          %562 = vmatpush2.msra.mxu0 0.0
          %563 = vmatprep.subr.mxu0 0.0
          %564 = vmatpush2.msra.mxu0 0.0
          %565 = vmatprep.subr.mxu0 0.0
          %566 = vmatpush2.msra.mxu0 0.0
          %567 = vmatprep.mubr.f32.mxu0 0.0
          %568 = vmatmul.mubr.f32.gmra.mxu0 %v480
          %v569 = vpop.f32.mrf.mxu0
          %v570 = vadd.f32 0.0, %v569
          %v571 = vpop.f32.mrf.mxu0
          %572 = vmatprep.mubr.f32.mxu0 0.0
          %573 = vmatmul.mubr.f32.gmra.mxu0 %v483
          %v574 = vpop.f32.mrf.mxu0
          %v575 = vadd.f32 0.0, %v574
          %v576 = vpop.f32.mrf.mxu0
          %577 = vmatprep.mubr.f32.mxu0 0.0
          %578 = vmatmul.mubr.f32.gmra.mxu0 %v486
          %v579 = vpop.f32.mrf.mxu0
          %v580 = vadd.f32 0.0, %v579
          %v581 = vpop.f32.mrf.mxu0
          %582 = vmatprep.mubr.f32.mxu0 0.0
          %583 = vmatmul.mubr.f32.gmra.mxu0 %v489
          %v584 = vpop.f32.mrf.mxu0
          %v585 = vadd.f32 0.0, %v584
          %v586 = vpop.f32.mrf.mxu0
          %587 = vmatprep.mubr.f32.mxu0 0.0
          %588 = vmatmul.mubr.f32.gmra.mxu0 %v492
          %v589 = vpop.f32.mrf.mxu0
          %v590 = vadd.f32 0.0, %v589
          %v591 = vpop.f32.mrf.mxu0
          %592 = vmatprep.mubr.f32.mxu0 0.0
          %593 = vmatmul.mubr.f32.gmra.mxu0 %v495
          %v594 = vpop.f32.mrf.mxu0
          %v595 = vadd.f32 0.0, %v594
          %v596 = vpop.f32.mrf.mxu0
          %597 = vmatprep.mubr.f32.mxu0 0.0
          %598 = vmatmul.mubr.f32.gmra.mxu0 %v498
          %v599 = vpop.f32.mrf.mxu0
          %v600 = vadd.f32 0.0, %v599
          %v601 = vpop.f32.mrf.mxu0
          %602 = vmatprep.mubr.f32.mxu0 0.0
          %603 = vmatmul.mubr.f32.gmra.mxu0 %v501
          %v604 = vpop.f32.mrf.mxu0
          %v605 = vadd.f32 0.0, %v604
          %v606 = vpop.f32.mrf.mxu0
          %607 = vdwg.mxu0
          %v608 = vld [vmem:[#allocation9] sm:$0xff]
          %v609 = vld [vmem:[#allocation9 + $0x8] sm:$0xff]
          %v610 = vld [vmem:[#allocation9 + $0x10] sm:$0xff]
          %v611 = vld [vmem:[#allocation9 + $0x18] sm:$0xff]
          %s612 = scalar_lea.vmem [#allocation7], 16
          %v613 = vld [vmem:[%s612] sm:$0xff]
          %v614 = vld [vmem:[%s612 + $0x8] sm:$0xff]
          %615 = vmatprep.subr.mxu0 0.0
          %616 = vmatpush1.msra.mxu0 0.0
          %617 = vmatprep.subr.mxu0 0.0
          %618 = vmatpush1.msra.mxu0 0.0
          %619 = vmatprep.subr.mxu0 0.0
          %620 = vmatpush1.msra.mxu0 0.0
          %621 = vmatprep.subr.mxu0 0.0
          %622 = vmatpush1.msra.mxu0 0.0
          %623 = vmatprep.subr.mxu0 0.0
          %624 = vmatpush1.msra.mxu0 0.0
          %625 = vmatprep.subr.mxu0 0.0
          %626 = vmatpush1.msra.mxu0 0.0
          %627 = vmatprep.subr.mxu0 0.0
          %628 = vmatpush1.msra.mxu0 0.0
          %629 = vmatprep.subr.mxu0 0.0
          %630 = vmatpush1.msra.mxu0 0.0
          %631 = vmatprep.subr.mxu0 0.0
          %632 = vmatpush1.msra.mxu0 0.0
          %633 = vmatprep.subr.mxu0 0.0
          %634 = vmatpush1.msra.mxu0 0.0
          %635 = vmatprep.subr.mxu0 0.0
          %636 = vmatpush1.msra.mxu0 0.0
          %637 = vmatprep.subr.mxu0 0.0
          %638 = vmatpush1.msra.mxu0 0.0
          %639 = vmatprep.subr.mxu0 0.0
          %640 = vmatpush1.msra.mxu0 0.0
          %641 = vmatprep.subr.mxu0 0.0
          %642 = vmatpush1.msra.mxu0 0.0
          %643 = vmatprep.subr.mxu0 0.0
          %644 = vmatpush1.msra.mxu0 %v614
          %645 = vmatprep.subr.mxu0 0.0
          %646 = vmatpush1.msra.mxu0 %v613
          %647 = vmatprep.subr.mxu0 0.0
          %648 = vmatpush2.msra.mxu0 0.0
          %649 = vmatprep.subr.mxu0 0.0
          %650 = vmatpush2.msra.mxu0 0.0
          %651 = vmatprep.subr.mxu0 0.0
          %652 = vmatpush2.msra.mxu0 0.0
          %653 = vmatprep.subr.mxu0 0.0
          %654 = vmatpush2.msra.mxu0 0.0
          %655 = vmatprep.subr.mxu0 0.0
          %656 = vmatpush2.msra.mxu0 0.0
          %657 = vmatprep.subr.mxu0 0.0
          %658 = vmatpush2.msra.mxu0 0.0
          %659 = vmatprep.subr.mxu0 0.0
          %660 = vmatpush2.msra.mxu0 0.0
          %661 = vmatprep.subr.mxu0 0.0
          %662 = vmatpush2.msra.mxu0 0.0
          %663 = vmatprep.subr.mxu0 0.0
          %664 = vmatpush2.msra.mxu0 0.0
          %665 = vmatprep.subr.mxu0 0.0
          %666 = vmatpush2.msra.mxu0 0.0
          %667 = vmatprep.subr.mxu0 0.0
          %668 = vmatpush2.msra.mxu0 0.0
          %669 = vmatprep.subr.mxu0 0.0
          %670 = vmatpush2.msra.mxu0 0.0
          %671 = vmatprep.subr.mxu0 0.0
          %672 = vmatpush2.msra.mxu0 0.0
          %673 = vmatprep.subr.mxu0 0.0
          %674 = vmatpush2.msra.mxu0 0.0
          %675 = vmatprep.subr.mxu0 0.0
          %676 = vmatpush2.msra.mxu0 0.0
          %677 = vmatprep.subr.mxu0 0.0
          %678 = vmatpush2.msra.mxu0 0.0
          %679 = vmatprep.mubr.f32.mxu0 0.0
          %680 = vmatmul.mubr.f32.gmra.mxu0 %v480
          %v681 = vpop.f32.mrf.mxu0
          %v682 = vadd.f32 0.0, %v681
          %v683 = vpop.f32.mrf.mxu0
          %684 = vmatprep.mubr.f32.mxu0 0.0
          %685 = vmatmul.mubr.f32.gmra.mxu0 %v483
          %v686 = vpop.f32.mrf.mxu0
          %v687 = vadd.f32 0.0, %v686
          %v688 = vpop.f32.mrf.mxu0
          %689 = vmatprep.mubr.f32.mxu0 0.0
          %690 = vmatmul.mubr.f32.gmra.mxu0 %v486
          %v691 = vpop.f32.mrf.mxu0
          %v692 = vadd.f32 0.0, %v691
          %v693 = vpop.f32.mrf.mxu0
          %694 = vmatprep.mubr.f32.mxu0 0.0
          %695 = vmatmul.mubr.f32.gmra.mxu0 %v489
          %v696 = vpop.f32.mrf.mxu0
          %v697 = vadd.f32 0.0, %v696
          %v698 = vpop.f32.mrf.mxu0
          %699 = vmatprep.mubr.f32.mxu0 0.0
          %700 = vmatmul.mubr.f32.gmra.mxu0 %v492
          %v701 = vpop.f32.mrf.mxu0
          %v702 = vadd.f32 0.0, %v701
          %v703 = vpop.f32.mrf.mxu0
          %704 = vmatprep.mubr.f32.mxu0 0.0
          %705 = vmatmul.mubr.f32.gmra.mxu0 %v495
          %v706 = vpop.f32.mrf.mxu0
          %v707 = vadd.f32 0.0, %v706
          %v708 = vpop.f32.mrf.mxu0
          %709 = vmatprep.mubr.f32.mxu0 0.0
          %710 = vmatmul.mubr.f32.gmra.mxu0 %v498
          %v711 = vpop.f32.mrf.mxu0
          %v712 = vadd.f32 0.0, %v711
          %v713 = vpop.f32.mrf.mxu0
          %714 = vmatprep.mubr.f32.mxu0 0.0
          %715 = vmatmul.mubr.f32.gmra.mxu0 %v501
          %v716 = vpop.f32.mrf.mxu0
          %v717 = vadd.f32 0.0, %v716
          %v718 = vpop.f32.mrf.mxu0
          %719 = vdwg.mxu0
          %s720 = scalar_lea.vmem [#allocation9], 32
          %v721 = vld [vmem:[%s720] sm:$0xff]
          %v722 = vld [vmem:[%s720 + $0x8] sm:$0xff]
          %v723 = vld [vmem:[%s720 + $0x10] sm:$0xff]
          %v724 = vld [vmem:[%s720 + $0x18] sm:$0xff]
          %vm725 = vcmask 523264
          %v727 = vsel %vm725, %v721, 0
          %v730 = vsel %vm725, %v722, 0
          %v733 = vsel %vm725, %v723, 0
          %v736 = vsel %vm725, %v724, 0
          %738 = vmatprep.subr.mxu0 0.0
          %739 = vmatpush1.msra.mxu0 0.0
          %740 = vmatprep.subr.mxu0 0.0
          %741 = vmatpush1.msra.mxu0 0.0
          %742 = vmatprep.subr.mxu0 0.0
          %743 = vmatpush1.msra.mxu0 0.0
          %744 = vmatprep.subr.mxu0 0.0
          %745 = vmatpush1.msra.mxu0 0.0
          %746 = vmatprep.subr.mxu0 0.0
          %747 = vmatpush1.msra.mxu0 0.0
          %748 = vmatprep.subr.mxu0 0.0
          %749 = vmatpush1.msra.mxu0 0.0
          %750 = vmatprep.subr.mxu0 0.0
          %751 = vmatpush1.msra.mxu0 0.0
          %752 = vmatprep.subr.mxu0 0.0
          %753 = vmatpush1.msra.mxu0 0.0
          %754 = vmatprep.subr.mxu0 0.0
          %755 = vmatpush1.msra.mxu0 %v717
          %756 = vmatprep.subr.mxu0 0.0
          %757 = vmatpush1.msra.mxu0 %v712
          %758 = vmatprep.subr.mxu0 0.0
          %759 = vmatpush1.msra.mxu0 %v707
          %760 = vmatprep.subr.mxu0 0.0
          %761 = vmatpush1.msra.mxu0 %v702
          %762 = vmatprep.subr.mxu0 0.0
          %763 = vmatpush1.msra.mxu0 %v697
          %764 = vmatprep.subr.mxu0 0.0
          %765 = vmatpush1.msra.mxu0 %v692
          %766 = vmatprep.subr.mxu0 0.0
          %767 = vmatpush1.msra.mxu0 %v687
          %768 = vmatprep.subr.mxu0 0.0
          %769 = vmatpush1.msra.mxu0 %v682
          %770 = vmatprep.subr.mxu0 0.0
          %771 = vmatpush2.msra.mxu0 0.0
          %772 = vmatprep.subr.mxu0 0.0
          %773 = vmatpush2.msra.mxu0 0.0
          %774 = vmatprep.subr.mxu0 0.0
          %775 = vmatpush2.msra.mxu0 0.0
          %776 = vmatprep.subr.mxu0 0.0
          %777 = vmatpush2.msra.mxu0 0.0
          %778 = vmatprep.subr.mxu0 0.0
          %779 = vmatpush2.msra.mxu0 0.0
          %780 = vmatprep.subr.mxu0 0.0
          %781 = vmatpush2.msra.mxu0 0.0
          %782 = vmatprep.subr.mxu0 0.0
          %783 = vmatpush2.msra.mxu0 0.0
          %784 = vmatprep.subr.mxu0 0.0
          %785 = vmatpush2.msra.mxu0 0.0
          %786 = vmatprep.subr.mxu0 0.0
          %787 = vmatpush2.msra.mxu0 0.0
          %788 = vmatprep.subr.mxu0 0.0
          %789 = vmatpush2.msra.mxu0 0.0
          %790 = vmatprep.subr.mxu0 0.0
          %791 = vmatpush2.msra.mxu0 0.0
          %792 = vmatprep.subr.mxu0 0.0
          %793 = vmatpush2.msra.mxu0 0.0
          %794 = vmatprep.subr.mxu0 0.0
          %795 = vmatpush2.msra.mxu0 0.0
          %796 = vmatprep.subr.mxu0 0.0
          %797 = vmatpush2.msra.mxu0 0.0
          %798 = vmatprep.subr.mxu0 0.0
          %799 = vmatpush2.msra.mxu0 0.0
          %800 = vmatprep.subr.mxu0 0.0
          %801 = vmatpush2.msra.mxu0 0.0
          %802 = vmatprep.mubr.f32.mxu0 0.0
          %803 = vmatmul.mubr.f32.gmra.mxu0 %v727
          %v804 = vpop.f32.mrf.mxu0
          %v805 = vadd.f32 0.0, %v804
          %v806 = vpop.f32.mrf.mxu0
          %807 = vmatprep.mubr.f32.mxu0 0.0
          %808 = vmatmul.mubr.f32.gmra.mxu0 %v730
          %v809 = vpop.f32.mrf.mxu0
          %v810 = vadd.f32 0.0, %v809
          %v811 = vpop.f32.mrf.mxu0
          %812 = vmatprep.mubr.f32.mxu0 0.0
          %813 = vmatmul.mubr.f32.gmra.mxu0 %v733
          %v814 = vpop.f32.mrf.mxu0
          %v815 = vadd.f32 0.0, %v814
          %v816 = vpop.f32.mrf.mxu0
          %817 = vmatprep.mubr.f32.mxu0 0.0
          %818 = vmatmul.mubr.f32.gmra.mxu0 %v736
          %v819 = vpop.f32.mrf.mxu0
          %v820 = vadd.f32 0.0, %v819
          %v821 = vpop.f32.mrf.mxu0
          %822 = vdwg.mxu0
          %v824 = vsel %vm725, %v608, 0
          %v827 = vsel %vm725, %v609, 0
          %v830 = vsel %vm725, %v610, 0
          %v833 = vsel %vm725, %v611, 0
          %835 = vmatprep.subr.mxu0 0.0
          %836 = vmatpush1.msra.mxu0 0.0
          %837 = vmatprep.subr.mxu0 0.0
          %838 = vmatpush1.msra.mxu0 0.0
          %839 = vmatprep.subr.mxu0 0.0
          %840 = vmatpush1.msra.mxu0 0.0
          %841 = vmatprep.subr.mxu0 0.0
          %842 = vmatpush1.msra.mxu0 0.0
          %843 = vmatprep.subr.mxu0 0.0
          %844 = vmatpush1.msra.mxu0 0.0
          %845 = vmatprep.subr.mxu0 0.0
          %846 = vmatpush1.msra.mxu0 0.0
          %847 = vmatprep.subr.mxu0 0.0
          %848 = vmatpush1.msra.mxu0 0.0
          %849 = vmatprep.subr.mxu0 0.0
          %850 = vmatpush1.msra.mxu0 0.0
          %851 = vmatprep.subr.mxu0 0.0
          %852 = vmatpush1.msra.mxu0 %v605
          %853 = vmatprep.subr.mxu0 0.0
          %854 = vmatpush1.msra.mxu0 %v600
          %855 = vmatprep.subr.mxu0 0.0
          %856 = vmatpush1.msra.mxu0 %v595
          %857 = vmatprep.subr.mxu0 0.0
          %858 = vmatpush1.msra.mxu0 %v590
          %859 = vmatprep.subr.mxu0 0.0
          %860 = vmatpush1.msra.mxu0 %v585
          %861 = vmatprep.subr.mxu0 0.0
          %862 = vmatpush1.msra.mxu0 %v580
          %863 = vmatprep.subr.mxu0 0.0
          %864 = vmatpush1.msra.mxu0 %v575
          %865 = vmatprep.subr.mxu0 0.0
          %866 = vmatpush1.msra.mxu0 %v570
          %867 = vmatprep.subr.mxu0 0.0
          %868 = vmatpush2.msra.mxu0 0.0
          %869 = vmatprep.subr.mxu0 0.0
          %870 = vmatpush2.msra.mxu0 0.0
          %871 = vmatprep.subr.mxu0 0.0
          %872 = vmatpush2.msra.mxu0 0.0
          %873 = vmatprep.subr.mxu0 0.0
          %874 = vmatpush2.msra.mxu0 0.0
          %875 = vmatprep.subr.mxu0 0.0
          %876 = vmatpush2.msra.mxu0 0.0
          %877 = vmatprep.subr.mxu0 0.0
          %878 = vmatpush2.msra.mxu0 0.0
          %879 = vmatprep.subr.mxu0 0.0
          %880 = vmatpush2.msra.mxu0 0.0
          %881 = vmatprep.subr.mxu0 0.0
          %882 = vmatpush2.msra.mxu0 0.0
          %883 = vmatprep.subr.mxu0 0.0
          %884 = vmatpush2.msra.mxu0 0.0
          %885 = vmatprep.subr.mxu0 0.0
          %886 = vmatpush2.msra.mxu0 0.0
          %887 = vmatprep.subr.mxu0 0.0
          %888 = vmatpush2.msra.mxu0 0.0
          %889 = vmatprep.subr.mxu0 0.0
          %890 = vmatpush2.msra.mxu0 0.0
          %891 = vmatprep.subr.mxu0 0.0
          %892 = vmatpush2.msra.mxu0 0.0
          %893 = vmatprep.subr.mxu0 0.0
          %894 = vmatpush2.msra.mxu0 0.0
          %895 = vmatprep.subr.mxu0 0.0
          %896 = vmatpush2.msra.mxu0 0.0
          %897 = vmatprep.subr.mxu0 0.0
          %898 = vmatpush2.msra.mxu0 0.0
          %899 = vmatprep.mubr.f32.mxu0 0.0
          %900 = vmatmul.mubr.f32.gmra.mxu0 %v824
          %v901 = vpop.f32.mrf.mxu0
          %v902 = vadd.f32 %v805, %v901
          %v903 = vpop.f32.mrf.mxu0
          %904 = vmatprep.mubr.f32.mxu0 0.0
          %905 = vmatmul.mubr.f32.gmra.mxu0 %v827
          %v906 = vpop.f32.mrf.mxu0
          %v907 = vadd.f32 %v810, %v906
          %v908 = vpop.f32.mrf.mxu0
          %909 = vmatprep.mubr.f32.mxu0 0.0
          %910 = vmatmul.mubr.f32.gmra.mxu0 %v830
          %v911 = vpop.f32.mrf.mxu0
          %v912 = vadd.f32 %v815, %v911
          %v913 = vpop.f32.mrf.mxu0
          %914 = vmatprep.mubr.f32.mxu0 0.0
          %915 = vmatmul.mubr.f32.gmra.mxu0 %v833
          %v916 = vpop.f32.mrf.mxu0
          %v917 = vadd.f32 %v820, %v916
          %v918 = vpop.f32.mrf.mxu0
          %919 = vdwg.mxu0
          %s920 = scalar_lea.vmem [#allocation7], 32
          %v921 = vld [vmem:[%s920] sm:$0xff]
          %v922 = vld [vmem:[%s920 + $0x8] sm:$0xff]
          %923 = vmatprep.subr.mxu0 0.0
          %924 = vmatpush1.msra.mxu0 0.0
          %925 = vmatprep.subr.mxu0 0.0
          %926 = vmatpush1.msra.mxu0 0.0
          %927 = vmatprep.subr.mxu0 0.0
          %928 = vmatpush1.msra.mxu0 0.0
          %929 = vmatprep.subr.mxu0 0.0
          %930 = vmatpush1.msra.mxu0 0.0
          %931 = vmatprep.subr.mxu0 0.0
          %932 = vmatpush1.msra.mxu0 0.0
          %933 = vmatprep.subr.mxu0 0.0
          %934 = vmatpush1.msra.mxu0 0.0
          %935 = vmatprep.subr.mxu0 0.0
          %936 = vmatpush1.msra.mxu0 0.0
          %937 = vmatprep.subr.mxu0 0.0
          %938 = vmatpush1.msra.mxu0 0.0
          %939 = vmatprep.subr.mxu0 0.0
          %940 = vmatpush1.msra.mxu0 0.0
          %941 = vmatprep.subr.mxu0 0.0
          %942 = vmatpush1.msra.mxu0 0.0
          %943 = vmatprep.subr.mxu0 0.0
          %944 = vmatpush1.msra.mxu0 0.0
          %945 = vmatprep.subr.mxu0 0.0
          %946 = vmatpush1.msra.mxu0 0.0
          %947 = vmatprep.subr.mxu0 0.0
          %948 = vmatpush1.msra.mxu0 0.0
          %949 = vmatprep.subr.mxu0 0.0
          %950 = vmatpush1.msra.mxu0 0.0
          %951 = vmatprep.subr.mxu0 0.0
          %952 = vmatpush1.msra.mxu0 %v922
          %953 = vmatprep.subr.mxu0 0.0
          %954 = vmatpush1.msra.mxu0 %v921
          %955 = vmatprep.subr.mxu0 0.0
          %956 = vmatpush2.msra.mxu0 0.0
          %957 = vmatprep.subr.mxu0 0.0
          %958 = vmatpush2.msra.mxu0 0.0
          %959 = vmatprep.subr.mxu0 0.0
          %960 = vmatpush2.msra.mxu0 0.0
          %961 = vmatprep.subr.mxu0 0.0
          %962 = vmatpush2.msra.mxu0 0.0
          %963 = vmatprep.subr.mxu0 0.0
          %964 = vmatpush2.msra.mxu0 0.0
          %965 = vmatprep.subr.mxu0 0.0
          %966 = vmatpush2.msra.mxu0 0.0
          %967 = vmatprep.subr.mxu0 0.0
          %968 = vmatpush2.msra.mxu0 0.0
          %969 = vmatprep.subr.mxu0 0.0
          %970 = vmatpush2.msra.mxu0 0.0
          %971 = vmatprep.subr.mxu0 0.0
          %972 = vmatpush2.msra.mxu0 0.0
          %973 = vmatprep.subr.mxu0 0.0
          %974 = vmatpush2.msra.mxu0 0.0
          %975 = vmatprep.subr.mxu0 0.0
          %976 = vmatpush2.msra.mxu0 0.0
          %977 = vmatprep.subr.mxu0 0.0
          %978 = vmatpush2.msra.mxu0 0.0
          %979 = vmatprep.subr.mxu0 0.0
          %980 = vmatpush2.msra.mxu0 0.0
          %981 = vmatprep.subr.mxu0 0.0
          %982 = vmatpush2.msra.mxu0 0.0
          %983 = vmatprep.subr.mxu0 0.0
          %984 = vmatpush2.msra.mxu0 0.0
          %985 = vmatprep.subr.mxu0 0.0
          %986 = vmatpush2.msra.mxu0 0.0
          %987 = vmatprep.mubr.f32.mxu0 0.0
          %988 = vmatmul.mubr.f32.gmra.mxu0 %v480
          %v989 = vpop.f32.mrf.mxu0
          %v990 = vadd.f32 0.0, %v989
          %v991 = vpop.f32.mrf.mxu0
          %992 = vmatprep.mubr.f32.mxu0 0.0
          %993 = vmatmul.mubr.f32.gmra.mxu0 %v483
          %v994 = vpop.f32.mrf.mxu0
          %v995 = vadd.f32 0.0, %v994
          %v996 = vpop.f32.mrf.mxu0
          %997 = vmatprep.mubr.f32.mxu0 0.0
          %998 = vmatmul.mubr.f32.gmra.mxu0 %v486
          %v999 = vpop.f32.mrf.mxu0
          %v1000 = vadd.f32 0.0, %v999
          %v1001 = vpop.f32.mrf.mxu0
          %1002 = vmatprep.mubr.f32.mxu0 0.0
          %1003 = vmatmul.mubr.f32.gmra.mxu0 %v489
          %v1004 = vpop.f32.mrf.mxu0
          %v1005 = vadd.f32 0.0, %v1004
          %v1006 = vpop.f32.mrf.mxu0
          %1007 = vmatprep.mubr.f32.mxu0 0.0
          %1008 = vmatmul.mubr.f32.gmra.mxu0 %v492
          %v1009 = vpop.f32.mrf.mxu0
          %v1010 = vadd.f32 0.0, %v1009
          %v1011 = vpop.f32.mrf.mxu0
          %1012 = vmatprep.mubr.f32.mxu0 0.0
          %1013 = vmatmul.mubr.f32.gmra.mxu0 %v495
          %v1014 = vpop.f32.mrf.mxu0
          %v1015 = vadd.f32 0.0, %v1014
          %v1016 = vpop.f32.mrf.mxu0
          %1017 = vmatprep.mubr.f32.mxu0 0.0
          %1018 = vmatmul.mubr.f32.gmra.mxu0 %v498
          %v1019 = vpop.f32.mrf.mxu0
          %v1020 = vadd.f32 0.0, %v1019
          %v1021 = vpop.f32.mrf.mxu0
          %1022 = vmatprep.mubr.f32.mxu0 0.0
          %1023 = vmatmul.mubr.f32.gmra.mxu0 %v501
          %v1024 = vpop.f32.mrf.mxu0
          %v1025 = vadd.f32 0.0, %v1024
          %v1026 = vpop.f32.mrf.mxu0
          %1027 = vdwg.mxu0
          %s1028 = scalar_lea.vmem [#allocation9], 64
          %v1029 = vld [vmem:[%s1028] sm:$0xff]
          %v1030 = vld [vmem:[%s1028 + $0x8] sm:$0xff]
          %v1031 = vld [vmem:[%s1028 + $0x10] sm:$0xff]
          %v1032 = vld [vmem:[%s1028 + $0x18] sm:$0xff]
          %v1034 = vsel %vm725, %v1029, 0
          %v1037 = vsel %vm725, %v1030, 0
          %v1040 = vsel %vm725, %v1031, 0
          %v1043 = vsel %vm725, %v1032, 0
          %1045 = vmatprep.subr.mxu0 0.0
          %1046 = vmatpush1.msra.mxu0 0.0
          %1047 = vmatprep.subr.mxu0 0.0
          %1048 = vmatpush1.msra.mxu0 0.0
          %1049 = vmatprep.subr.mxu0 0.0
          %1050 = vmatpush1.msra.mxu0 0.0
          %1051 = vmatprep.subr.mxu0 0.0
          %1052 = vmatpush1.msra.mxu0 0.0
          %1053 = vmatprep.subr.mxu0 0.0
          %1054 = vmatpush1.msra.mxu0 0.0
          %1055 = vmatprep.subr.mxu0 0.0
          %1056 = vmatpush1.msra.mxu0 0.0
          %1057 = vmatprep.subr.mxu0 0.0
          %1058 = vmatpush1.msra.mxu0 0.0
          %1059 = vmatprep.subr.mxu0 0.0
          %1060 = vmatpush1.msra.mxu0 0.0
          %1061 = vmatprep.subr.mxu0 0.0
          %1062 = vmatpush1.msra.mxu0 %v1025
          %1063 = vmatprep.subr.mxu0 0.0
          %1064 = vmatpush1.msra.mxu0 %v1020
          %1065 = vmatprep.subr.mxu0 0.0
          %1066 = vmatpush1.msra.mxu0 %v1015
          %1067 = vmatprep.subr.mxu0 0.0
          %1068 = vmatpush1.msra.mxu0 %v1010
          %1069 = vmatprep.subr.mxu0 0.0
          %1070 = vmatpush1.msra.mxu0 %v1005
          %1071 = vmatprep.subr.mxu0 0.0
          %1072 = vmatpush1.msra.mxu0 %v1000
          %1073 = vmatprep.subr.mxu0 0.0
          %1074 = vmatpush1.msra.mxu0 %v995
          %1075 = vmatprep.subr.mxu0 0.0
          %1076 = vmatpush1.msra.mxu0 %v990
          %1077 = vmatprep.subr.mxu0 0.0
          %1078 = vmatpush2.msra.mxu0 0.0
          %1079 = vmatprep.subr.mxu0 0.0
          %1080 = vmatpush2.msra.mxu0 0.0
          %1081 = vmatprep.subr.mxu0 0.0
          %1082 = vmatpush2.msra.mxu0 0.0
          %1083 = vmatprep.subr.mxu0 0.0
          %1084 = vmatpush2.msra.mxu0 0.0
          %1085 = vmatprep.subr.mxu0 0.0
          %1086 = vmatpush2.msra.mxu0 0.0
          %1087 = vmatprep.subr.mxu0 0.0
          %1088 = vmatpush2.msra.mxu0 0.0
          %1089 = vmatprep.subr.mxu0 0.0
          %1090 = vmatpush2.msra.mxu0 0.0
          %1091 = vmatprep.subr.mxu0 0.0
          %1092 = vmatpush2.msra.mxu0 0.0
          %1093 = vmatprep.subr.mxu0 0.0
          %1094 = vmatpush2.msra.mxu0 0.0
          %1095 = vmatprep.subr.mxu0 0.0
          %1096 = vmatpush2.msra.mxu0 0.0
          %1097 = vmatprep.subr.mxu0 0.0
          %1098 = vmatpush2.msra.mxu0 0.0
          %1099 = vmatprep.subr.mxu0 0.0
          %1100 = vmatpush2.msra.mxu0 0.0
          %1101 = vmatprep.subr.mxu0 0.0
          %1102 = vmatpush2.msra.mxu0 0.0
          %1103 = vmatprep.subr.mxu0 0.0
          %1104 = vmatpush2.msra.mxu0 0.0
          %1105 = vmatprep.subr.mxu0 0.0
          %1106 = vmatpush2.msra.mxu0 0.0
          %1107 = vmatprep.subr.mxu0 0.0
          %1108 = vmatpush2.msra.mxu0 0.0
          %1109 = vmatprep.mubr.f32.mxu0 0.0
          %1110 = vmatmul.mubr.f32.gmra.mxu0 %v1034
          %v1111 = vpop.f32.mrf.mxu0
          %v1112 = vadd.f32 0.0, %v1111
          %v1113 = vpop.f32.mrf.mxu0
          %1114 = vmatprep.mubr.f32.mxu0 0.0
          %1115 = vmatmul.mubr.f32.gmra.mxu0 %v1037
          %v1116 = vpop.f32.mrf.mxu0
          %v1117 = vadd.f32 0.0, %v1116
          %v1118 = vpop.f32.mrf.mxu0
          %1119 = vmatprep.mubr.f32.mxu0 0.0
          %1120 = vmatmul.mubr.f32.gmra.mxu0 %v1040
          %v1121 = vpop.f32.mrf.mxu0
          %v1122 = vadd.f32 0.0, %v1121
          %v1123 = vpop.f32.mrf.mxu0
          %1124 = vmatprep.mubr.f32.mxu0 0.0
          %1125 = vmatmul.mubr.f32.gmra.mxu0 %v1043
          %v1126 = vpop.f32.mrf.mxu0
          %v1127 = vadd.f32 0.0, %v1126
          %v1128 = vpop.f32.mrf.mxu0
          %1129 = vdwg.mxu0
          %v1130 = vadd.f32 %v902, %v1112
          %v1131 = vadd.f32 %v907, %v1117
          %v1132 = vadd.f32 %v912, %v1122
          %v1133 = vadd.f32 %v917, %v1127
          %s1134 = smul.u32 %s30, 32
          %s1135 = scalar_lea.vmem [#allocation2], %s1134
          %vm1136 = vcmask 64512
          %1137 = vst.msk [vmem:[%s1135] sm:$0xff] %vm1136, %v1130
          %1138 = vst.msk [vmem:[%s1135 + $0x8] sm:$0xff] %vm1136, %v1131
          %1139 = vst.msk [vmem:[%s1135 + $0x10] sm:$0xff] %vm1136, %v1132
          %1140 = vst.msk [vmem:[%s1135 + $0x18] sm:$0xff] %vm1136, %v1133
        $region88: #{forward.1} parent=59 // pred_fallthru
          _
        %p1141 = scmp.eq.s32.totalorder %s30, 2
        // Predicated region
        $region89: #{forward.1} parent=59 // pred_check
          %p1142 = pneg %p1141
        $region90: #{forward.1} parent=59 // pred_check_branch
          %1144 = sbr.rel (%p1142) target = $region92
        $region91: #{forward.1} parent=59 // pred_region
          %v1145 = vld [vmem:[#allocation2] sm:$0xff]
          %v1146 = vld [vmem:[#allocation2 + $0x8] sm:$0xff]
          %v1147 = vld [vmem:[#allocation2 + $0x10] sm:$0xff]
          %v1148 = vld [vmem:[#allocation2 + $0x18] sm:$0xff]
          %v1149 = vld [vmem:[#allocation2 + $0x20] sm:$0xff]
          %v1150 = vld [vmem:[#allocation2 + $0x28] sm:$0xff]
          %v1151 = vld [vmem:[#allocation2 + $0x30] sm:$0xff]
          %v1152 = vld [vmem:[#allocation2 + $0x38] sm:$0xff]
          %vm1153 = vcmask 64512
          %v1154 = vsel %vm1153, %v1145, 0.0
          %v1155 = vsel %vm1153, %v1149, 0.0
          %v1156 = vadd.f32 %v1154, %v1155
          %v1157 = vsel %vm1153, %v1146, 0.0
          %v1158 = vsel %vm1153, %v1150, 0.0
          %v1159 = vadd.f32 %v1157, %v1158
          %v1160 = vsel %vm1153, %v1147, 0.0
          %v1161 = vsel %vm1153, %v1151, 0.0
          %v1162 = vadd.f32 %v1160, %v1161
          %v1163 = vsel %vm1153, %v1148, 0.0
          %v1164 = vsel %vm1153, %v1152, 0.0
          %v1165 = vadd.f32 %v1163, %v1164
          %v1166 = vmul.f32 %v1145, %v1145
          %v1167 = vmul.f32 %v1146, %v1146
          %v1168 = vmul.f32 %v1147, %v1147
          %v1169 = vmul.f32 %v1148, %v1148
          %v1170 = vmul.f32 %v1149, %v1149
          %v1171 = vmul.f32 %v1150, %v1150
          %v1172 = vmul.f32 %v1151, %v1151
          %v1173 = vmul.f32 %v1152, %v1152
          %v1174 = vsel %vm1153, %v1166, 0.0
          %v1175 = vsel %vm1153, %v1170, 0.0
          %v1176 = vadd.f32 %v1174, %v1175
          %v1177 = vsel %vm1153, %v1167, 0.0
          %v1178 = vsel %vm1153, %v1171, 0.0
          %v1179 = vadd.f32 %v1177, %v1178
          %v1180 = vsel %vm1153, %v1168, 0.0
          %v1181 = vsel %vm1153, %v1172, 0.0
          %v1182 = vadd.f32 %v1180, %v1181
          %v1183 = vsel %vm1153, %v1169, 0.0
          %v1184 = vsel %vm1153, %v1173, 0.0
          %v1185 = vadd.f32 %v1183, %v1184
          %v1186 = vld [vmem:[%s7] sm:$0xff]
          %v1188 = vsel %vm1153, %v1156, 0
          %v1191 = vsel %vm1153, %v1159, 0
          %v1194 = vsel %vm1153, %v1162, 0
          %v1197 = vsel %vm1153, %v1165, 0
          %1199 = vmatprep.subr.mxu0 0.0
          %1200 = vmatpush1.msra.mxu0 0.0
          %1201 = vmatprep.subr.mxu0 0.0
          %1202 = vmatpush1.msra.mxu0 0.0
          %1203 = vmatprep.subr.mxu0 0.0
          %1204 = vmatpush1.msra.mxu0 0.0
          %1205 = vmatprep.subr.mxu0 0.0
          %1206 = vmatpush1.msra.mxu0 0.0
          %1207 = vmatprep.subr.mxu0 0.0
          %1208 = vmatpush1.msra.mxu0 0.0
          %1209 = vmatprep.subr.mxu0 0.0
          %1210 = vmatpush1.msra.mxu0 0.0
          %1211 = vmatprep.subr.mxu0 0.0
          %1212 = vmatpush1.msra.mxu0 0.0
          %1213 = vmatprep.subr.mxu0 0.0
          %1214 = vmatpush1.msra.mxu0 0.0
          %1215 = vmatprep.subr.mxu0 0.0
          %1216 = vmatpush1.msra.mxu0 0.0
          %1217 = vmatprep.subr.mxu0 0.0
          %1218 = vmatpush1.msra.mxu0 0.0
          %1219 = vmatprep.subr.mxu0 0.0
          %1220 = vmatpush1.msra.mxu0 0.0
          %1221 = vmatprep.subr.mxu0 0.0
          %1222 = vmatpush1.msra.mxu0 0.0
          %1223 = vmatprep.subr.mxu0 0.0
          %1224 = vmatpush1.msra.mxu0 0.0
          %1225 = vmatprep.subr.mxu0 0.0
          %1226 = vmatpush1.msra.mxu0 0.0
          %1227 = vmatprep.subr.mxu0 0.0
          %1228 = vmatpush1.msra.mxu0 0.0
          %1229 = vmatprep.subr.mxu0 0.0
          %1230 = vmatpush1.msra.mxu0 %v1186
          %1231 = vmatprep.subr.mxu0 0.0
          %1232 = vmatpush2.msra.mxu0 0.0
          %1233 = vmatprep.subr.mxu0 0.0
          %1234 = vmatpush2.msra.mxu0 0.0
          %1235 = vmatprep.subr.mxu0 0.0
          %1236 = vmatpush2.msra.mxu0 0.0
          %1237 = vmatprep.subr.mxu0 0.0
          %1238 = vmatpush2.msra.mxu0 0.0
          %1239 = vmatprep.subr.mxu0 0.0
          %1240 = vmatpush2.msra.mxu0 0.0
          %1241 = vmatprep.subr.mxu0 0.0
          %1242 = vmatpush2.msra.mxu0 0.0
          %1243 = vmatprep.subr.mxu0 0.0
          %1244 = vmatpush2.msra.mxu0 0.0
          %1245 = vmatprep.subr.mxu0 0.0
          %1246 = vmatpush2.msra.mxu0 0.0
          %1247 = vmatprep.subr.mxu0 0.0
          %1248 = vmatpush2.msra.mxu0 0.0
          %1249 = vmatprep.subr.mxu0 0.0
          %1250 = vmatpush2.msra.mxu0 0.0
          %1251 = vmatprep.subr.mxu0 0.0
          %1252 = vmatpush2.msra.mxu0 0.0
          %1253 = vmatprep.subr.mxu0 0.0
          %1254 = vmatpush2.msra.mxu0 0.0
          %1255 = vmatprep.subr.mxu0 0.0
          %1256 = vmatpush2.msra.mxu0 0.0
          %1257 = vmatprep.subr.mxu0 0.0
          %1258 = vmatpush2.msra.mxu0 0.0
          %1259 = vmatprep.subr.mxu0 0.0
          %1260 = vmatpush2.msra.mxu0 0.0
          %1261 = vmatprep.subr.mxu0 0.0
          %1262 = vmatpush2.msra.mxu0 0.0
          %1263 = vmatprep.mubr.f32.mxu0 0.0
          %1264 = vmatmul.mubr.f32.gmra.mxu0 %v1188
          %v1265 = vpop.f32.mrf.mxu0
          %v1266 = vadd.f32 0.0, %v1265
          %v1267 = vpop.f32.mrf.mxu0
          %1268 = vmatprep.mubr.f32.mxu0 0.0
          %1269 = vmatmul.mubr.f32.gmra.mxu0 %v1191
          %v1270 = vpop.f32.mrf.mxu0
          %v1271 = vadd.f32 0.0, %v1270
          %v1272 = vpop.f32.mrf.mxu0
          %1273 = vmatprep.mubr.f32.mxu0 0.0
          %1274 = vmatmul.mubr.f32.gmra.mxu0 %v1194
          %v1275 = vpop.f32.mrf.mxu0
          %v1276 = vadd.f32 0.0, %v1275
          %v1277 = vpop.f32.mrf.mxu0
          %1278 = vmatprep.mubr.f32.mxu0 0.0
          %1279 = vmatmul.mubr.f32.gmra.mxu0 %v1197
          %v1280 = vpop.f32.mrf.mxu0
          %v1281 = vadd.f32 0.0, %v1280
          %v1282 = vpop.f32.mrf.mxu0
          %1283 = vdwg.mxu0
          %v1285 = vsel %vm1153, %v1176, 0
          %v1288 = vsel %vm1153, %v1179, 0
          %v1291 = vsel %vm1153, %v1182, 0
          %v1294 = vsel %vm1153, %v1185, 0
          %1296 = vmatprep.subr.mxu0 0.0
          %1297 = vmatpush1.msra.mxu0 0.0
          %1298 = vmatprep.subr.mxu0 0.0
          %1299 = vmatpush1.msra.mxu0 0.0
          %1300 = vmatprep.subr.mxu0 0.0
          %1301 = vmatpush1.msra.mxu0 0.0
          %1302 = vmatprep.subr.mxu0 0.0
          %1303 = vmatpush1.msra.mxu0 0.0
          %1304 = vmatprep.subr.mxu0 0.0
          %1305 = vmatpush1.msra.mxu0 0.0
          %1306 = vmatprep.subr.mxu0 0.0
          %1307 = vmatpush1.msra.mxu0 0.0
          %1308 = vmatprep.subr.mxu0 0.0
          %1309 = vmatpush1.msra.mxu0 0.0
          %1310 = vmatprep.subr.mxu0 0.0
          %1311 = vmatpush1.msra.mxu0 0.0
          %1312 = vmatprep.subr.mxu0 0.0
          %1313 = vmatpush1.msra.mxu0 0.0
          %1314 = vmatprep.subr.mxu0 0.0
          %1315 = vmatpush1.msra.mxu0 0.0
          %1316 = vmatprep.subr.mxu0 0.0
          %1317 = vmatpush1.msra.mxu0 0.0
          %1318 = vmatprep.subr.mxu0 0.0
          %1319 = vmatpush1.msra.mxu0 0.0
          %1320 = vmatprep.subr.mxu0 0.0
          %1321 = vmatpush1.msra.mxu0 0.0
          %1322 = vmatprep.subr.mxu0 0.0
          %1323 = vmatpush1.msra.mxu0 0.0
          %1324 = vmatprep.subr.mxu0 0.0
          %1325 = vmatpush1.msra.mxu0 0.0
          %1326 = vmatprep.subr.mxu0 0.0
          %1327 = vmatpush1.msra.mxu0 %v1186
          %1328 = vmatprep.subr.mxu0 0.0
          %1329 = vmatpush2.msra.mxu0 0.0
          %1330 = vmatprep.subr.mxu0 0.0
          %1331 = vmatpush2.msra.mxu0 0.0
          %1332 = vmatprep.subr.mxu0 0.0
          %1333 = vmatpush2.msra.mxu0 0.0
          %1334 = vmatprep.subr.mxu0 0.0
          %1335 = vmatpush2.msra.mxu0 0.0
          %1336 = vmatprep.subr.mxu0 0.0
          %1337 = vmatpush2.msra.mxu0 0.0
          %1338 = vmatprep.subr.mxu0 0.0
          %1339 = vmatpush2.msra.mxu0 0.0
          %1340 = vmatprep.subr.mxu0 0.0
          %1341 = vmatpush2.msra.mxu0 0.0
          %1342 = vmatprep.subr.mxu0 0.0
          %1343 = vmatpush2.msra.mxu0 0.0
          %1344 = vmatprep.subr.mxu0 0.0
          %1345 = vmatpush2.msra.mxu0 0.0
          %1346 = vmatprep.subr.mxu0 0.0
          %1347 = vmatpush2.msra.mxu0 0.0
          %1348 = vmatprep.subr.mxu0 0.0
          %1349 = vmatpush2.msra.mxu0 0.0
          %1350 = vmatprep.subr.mxu0 0.0
          %1351 = vmatpush2.msra.mxu0 0.0
          %1352 = vmatprep.subr.mxu0 0.0
          %1353 = vmatpush2.msra.mxu0 0.0
          %1354 = vmatprep.subr.mxu0 0.0
          %1355 = vmatpush2.msra.mxu0 0.0
          %1356 = vmatprep.subr.mxu0 0.0
          %1357 = vmatpush2.msra.mxu0 0.0
          %1358 = vmatprep.subr.mxu0 0.0
          %1359 = vmatpush2.msra.mxu0 0.0
          %1360 = vmatprep.mubr.f32.mxu0 0.0
          %1361 = vmatmul.mubr.f32.gmra.mxu0 %v1285
          %v1362 = vpop.f32.mrf.mxu0
          %v1363 = vadd.f32 0.0, %v1362
          %v1364 = vpop.f32.mrf.mxu0
          %1365 = vmatprep.mubr.f32.mxu0 0.0
          %1366 = vmatmul.mubr.f32.gmra.mxu0 %v1288
          %v1367 = vpop.f32.mrf.mxu0
          %v1368 = vadd.f32 0.0, %v1367
          %v1369 = vpop.f32.mrf.mxu0
          %1370 = vmatprep.mubr.f32.mxu0 0.0
          %1371 = vmatmul.mubr.f32.gmra.mxu0 %v1291
          %v1372 = vpop.f32.mrf.mxu0
          %v1373 = vadd.f32 0.0, %v1372
          %v1374 = vpop.f32.mrf.mxu0
          %1375 = vmatprep.mubr.f32.mxu0 0.0
          %1376 = vmatmul.mubr.f32.gmra.mxu0 %v1294
          %v1377 = vpop.f32.mrf.mxu0
          %v1378 = vadd.f32 0.0, %v1377
          %v1379 = vpop.f32.mrf.mxu0
          %1380 = vdwg.mxu0
          %v1381 = vld [vmem:[#allocation13] sm:$0xf]
          %vm1382 = vcmask 261120
          %v1384 = vsel %vm1382, %v1381, 0
          %1386 = vmatprep.subr.mxu0 0.0
          %1387 = vmatpush1.msra.mxu0 0.0
          %1388 = vmatprep.subr.mxu0 0.0
          %1389 = vmatpush1.msra.mxu0 0.0
          %1390 = vmatprep.subr.mxu0 0.0
          %1391 = vmatpush1.msra.mxu0 0.0
          %1392 = vmatprep.subr.mxu0 0.0
          %1393 = vmatpush1.msra.mxu0 0.0
          %1394 = vmatprep.subr.mxu0 0.0
          %1395 = vmatpush1.msra.mxu0 0.0
          %1396 = vmatprep.subr.mxu0 0.0
          %1397 = vmatpush1.msra.mxu0 0.0
          %1398 = vmatprep.subr.mxu0 0.0
          %1399 = vmatpush1.msra.mxu0 0.0
          %1400 = vmatprep.subr.mxu0 0.0
          %1401 = vmatpush1.msra.mxu0 0.0
          %1402 = vmatprep.subr.mxu0 0.0
          %1403 = vmatpush1.msra.mxu0 0.0
          %1404 = vmatprep.subr.mxu0 0.0
          %1405 = vmatpush1.msra.mxu0 0.0
          %1406 = vmatprep.subr.mxu0 0.0
          %1407 = vmatpush1.msra.mxu0 0.0
          %1408 = vmatprep.subr.mxu0 0.0
          %1409 = vmatpush1.msra.mxu0 0.0
          %1410 = vmatprep.subr.mxu0 0.0
          %1411 = vmatpush1.msra.mxu0 %v1281
          %1412 = vmatprep.subr.mxu0 0.0
          %1413 = vmatpush1.msra.mxu0 %v1276
          %1414 = vmatprep.subr.mxu0 0.0
          %1415 = vmatpush1.msra.mxu0 %v1271
          %1416 = vmatprep.subr.mxu0 0.0
          %1417 = vmatpush1.msra.mxu0 %v1266
          %1418 = vmatprep.subr.mxu0 0.0
          %1419 = vmatpush2.msra.mxu0 0.0
          %1420 = vmatprep.subr.mxu0 0.0
          %1421 = vmatpush2.msra.mxu0 0.0
          %1422 = vmatprep.subr.mxu0 0.0
          %1423 = vmatpush2.msra.mxu0 0.0
          %1424 = vmatprep.subr.mxu0 0.0
          %1425 = vmatpush2.msra.mxu0 0.0
          %1426 = vmatprep.subr.mxu0 0.0
          %1427 = vmatpush2.msra.mxu0 0.0
          %1428 = vmatprep.subr.mxu0 0.0
          %1429 = vmatpush2.msra.mxu0 0.0
          %1430 = vmatprep.subr.mxu0 0.0
          %1431 = vmatpush2.msra.mxu0 0.0
          %1432 = vmatprep.subr.mxu0 0.0
          %1433 = vmatpush2.msra.mxu0 0.0
          %1434 = vmatprep.subr.mxu0 0.0
          %1435 = vmatpush2.msra.mxu0 0.0
          %1436 = vmatprep.subr.mxu0 0.0
          %1437 = vmatpush2.msra.mxu0 0.0
          %1438 = vmatprep.subr.mxu0 0.0
          %1439 = vmatpush2.msra.mxu0 0.0
          %1440 = vmatprep.subr.mxu0 0.0
          %1441 = vmatpush2.msra.mxu0 0.0
          %1442 = vmatprep.subr.mxu0 0.0
          %1443 = vmatpush2.msra.mxu0 0.0
          %1444 = vmatprep.subr.mxu0 0.0
          %1445 = vmatpush2.msra.mxu0 0.0
          %1446 = vmatprep.subr.mxu0 0.0
          %1447 = vmatpush2.msra.mxu0 0.0
          %1448 = vmatprep.subr.mxu0 0.0
          %1449 = vmatpush2.msra.mxu0 0.0
          %1450 = vmatprep.mubr.f32.mxu0 0.0
          %1451 = vmatmul.mubr.f32.gmra.mxu0 %v1384
          %v1452 = vpop.f32.mrf.mxu0
          %v1453 = vadd.f32 0.0, %v1452
          %v1454 = vpop.f32.mrf.mxu0
          %1455 = vdwg.mxu0
          %1456 = vmatprep.subr.mxu0 0.0
          %1457 = vmatpush1.msra.mxu0 0.0
          %1458 = vmatprep.subr.mxu0 0.0
          %1459 = vmatpush1.msra.mxu0 0.0
          %1460 = vmatprep.subr.mxu0 0.0
          %1461 = vmatpush1.msra.mxu0 0.0
          %1462 = vmatprep.subr.mxu0 0.0
          %1463 = vmatpush1.msra.mxu0 0.0
          %1464 = vmatprep.subr.mxu0 0.0
          %1465 = vmatpush1.msra.mxu0 0.0
          %1466 = vmatprep.subr.mxu0 0.0
          %1467 = vmatpush1.msra.mxu0 0.0
          %1468 = vmatprep.subr.mxu0 0.0
          %1469 = vmatpush1.msra.mxu0 0.0
          %1470 = vmatprep.subr.mxu0 0.0
          %1471 = vmatpush1.msra.mxu0 0.0
          %1472 = vmatprep.subr.mxu0 0.0
          %1473 = vmatpush1.msra.mxu0 0.0
          %1474 = vmatprep.subr.mxu0 0.0
          %1475 = vmatpush1.msra.mxu0 0.0
          %1476 = vmatprep.subr.mxu0 0.0
          %1477 = vmatpush1.msra.mxu0 0.0
          %1478 = vmatprep.subr.mxu0 0.0
          %1479 = vmatpush1.msra.mxu0 0.0
          %1480 = vmatprep.subr.mxu0 0.0
          %1481 = vmatpush1.msra.mxu0 %v1378
          %1482 = vmatprep.subr.mxu0 0.0
          %1483 = vmatpush1.msra.mxu0 %v1373
          %1484 = vmatprep.subr.mxu0 0.0
          %1485 = vmatpush1.msra.mxu0 %v1368
          %1486 = vmatprep.subr.mxu0 0.0
          %1487 = vmatpush1.msra.mxu0 %v1363
          %1488 = vmatprep.subr.mxu0 0.0
          %1489 = vmatpush2.msra.mxu0 0.0
          %1490 = vmatprep.subr.mxu0 0.0
          %1491 = vmatpush2.msra.mxu0 0.0
          %1492 = vmatprep.subr.mxu0 0.0
          %1493 = vmatpush2.msra.mxu0 0.0
          %1494 = vmatprep.subr.mxu0 0.0
          %1495 = vmatpush2.msra.mxu0 0.0
          %1496 = vmatprep.subr.mxu0 0.0
          %1497 = vmatpush2.msra.mxu0 0.0
          %1498 = vmatprep.subr.mxu0 0.0
          %1499 = vmatpush2.msra.mxu0 0.0
          %1500 = vmatprep.subr.mxu0 0.0
          %1501 = vmatpush2.msra.mxu0 0.0
          %1502 = vmatprep.subr.mxu0 0.0
          %1503 = vmatpush2.msra.mxu0 0.0
          %1504 = vmatprep.subr.mxu0 0.0
          %1505 = vmatpush2.msra.mxu0 0.0
          %1506 = vmatprep.subr.mxu0 0.0
          %1507 = vmatpush2.msra.mxu0 0.0
          %1508 = vmatprep.subr.mxu0 0.0
          %1509 = vmatpush2.msra.mxu0 0.0
          %1510 = vmatprep.subr.mxu0 0.0
          %1511 = vmatpush2.msra.mxu0 0.0
          %1512 = vmatprep.subr.mxu0 0.0
          %1513 = vmatpush2.msra.mxu0 0.0
          %1514 = vmatprep.subr.mxu0 0.0
          %1515 = vmatpush2.msra.mxu0 0.0
          %1516 = vmatprep.subr.mxu0 0.0
          %1517 = vmatpush2.msra.mxu0 0.0
          %1518 = vmatprep.subr.mxu0 0.0
          %1519 = vmatpush2.msra.mxu0 0.0
          %1520 = vmatprep.mubr.f32.mxu0 0.0
          %1521 = vmatmul.mubr.f32.gmra.mxu0 %v1384
          %v1522 = vpop.f32.mrf.mxu0
          %v1523 = vadd.f32 0.0, %v1522
          %v1524 = vpop.f32.mrf.mxu0
          %1525 = vdwg.mxu0
          %v1526 = vmul.f32 %v1453, 0.0078125
          %v1527 = vmul.f32 %v1523, 0.0078125
          %v1528 = vmul.f32 %v1526, %v1526
          %v1529 = vsub.f32 %v1527, %v1528
          %v1530 = vmax.f32 %v1529, 0.0
          %v1531 = vld [vmem:[%s8] sm:$0xf]
          %v1532 = vadd.f32 %v1530, 1e-05
          %v1533 = vrsqrt.pop %v1532
          %v1534 = vmul.f32 %v1531, %v1533
          %v1535 = vld [vmem:[%s9] sm:$0xf]
          %v1536 = vmul.f32 %v1526, %v1534
          %v1537 = vsub.f32 %v1535, %v1536
          %v1538 = vld [vmem:[%s6] sm:$0xff]
          %v1539 = vld [vmem:[%s6 + $0x8] sm:$0xff]
          %v1540 = vld [vmem:[%s6 + $0x10] sm:$0xff]
          %v1541 = vld [vmem:[%s6 + $0x18] sm:$0xff]
          %vm1542 = vcmask 31744
          %v1544 = vsel %vm1542, %v1538, 0
          %v1547 = vsel %vm1542, %v1539, 0
          %v1550 = vsel %vm1542, %v1540, 0
          %v1553 = vsel %vm1542, %v1541, 0
          %vm1555 = vcmask 1043456
          %v1557 = vsel %vm1555, %v1534, 0
          %1559 = vmatprep.subr.mxu0 0.0
          %1560 = vmatpush1.msra.mxu0 0.0
          %1561 = vmatprep.subr.mxu0 0.0
          %1562 = vmatpush1.msra.mxu0 0.0
          %1563 = vmatprep.subr.mxu0 0.0
          %1564 = vmatpush1.msra.mxu0 0.0
          %1565 = vmatprep.subr.mxu0 0.0
          %1566 = vmatpush1.msra.mxu0 0.0
          %1567 = vmatprep.subr.mxu0 0.0
          %1568 = vmatpush1.msra.mxu0 0.0
          %1569 = vmatprep.subr.mxu0 0.0
          %1570 = vmatpush1.msra.mxu0 0.0
          %1571 = vmatprep.subr.mxu0 0.0
          %1572 = vmatpush1.msra.mxu0 0.0
          %1573 = vmatprep.subr.mxu0 0.0
          %1574 = vmatpush1.msra.mxu0 0.0
          %1575 = vmatprep.subr.mxu0 0.0
          %1576 = vmatpush1.msra.mxu0 0.0
          %1577 = vmatprep.subr.mxu0 0.0
          %1578 = vmatpush1.msra.mxu0 0.0
          %1579 = vmatprep.subr.mxu0 0.0
          %1580 = vmatpush1.msra.mxu0 0.0
          %1581 = vmatprep.subr.mxu0 0.0
          %1582 = vmatpush1.msra.mxu0 0.0
          %1583 = vmatprep.subr.mxu0 0.0
          %1584 = vmatpush1.msra.mxu0 0.0
          %1585 = vmatprep.subr.mxu0 0.0
          %1586 = vmatpush1.msra.mxu0 0.0
          %1587 = vmatprep.subr.mxu0 0.0
          %1588 = vmatpush1.msra.mxu0 0.0
          %1589 = vmatprep.subr.mxu0 0.0
          %1590 = vmatpush1.msra.mxu0 %v1557
          %1591 = vmatprep.subr.mxu0 0.0
          %1592 = vmatpush2.msra.mxu0 0.0
          %1593 = vmatprep.subr.mxu0 0.0
          %1594 = vmatpush2.msra.mxu0 0.0
          %1595 = vmatprep.subr.mxu0 0.0
          %1596 = vmatpush2.msra.mxu0 0.0
          %1597 = vmatprep.subr.mxu0 0.0
          %1598 = vmatpush2.msra.mxu0 0.0
          %1599 = vmatprep.subr.mxu0 0.0
          %1600 = vmatpush2.msra.mxu0 0.0
          %1601 = vmatprep.subr.mxu0 0.0
          %1602 = vmatpush2.msra.mxu0 0.0
          %1603 = vmatprep.subr.mxu0 0.0
          %1604 = vmatpush2.msra.mxu0 0.0
          %1605 = vmatprep.subr.mxu0 0.0
          %1606 = vmatpush2.msra.mxu0 0.0
          %1607 = vmatprep.subr.mxu0 0.0
          %1608 = vmatpush2.msra.mxu0 0.0
          %1609 = vmatprep.subr.mxu0 0.0
          %1610 = vmatpush2.msra.mxu0 0.0
          %1611 = vmatprep.subr.mxu0 0.0
          %1612 = vmatpush2.msra.mxu0 0.0
          %1613 = vmatprep.subr.mxu0 0.0
          %1614 = vmatpush2.msra.mxu0 0.0
          %1615 = vmatprep.subr.mxu0 0.0
          %1616 = vmatpush2.msra.mxu0 0.0
          %1617 = vmatprep.subr.mxu0 0.0
          %1618 = vmatpush2.msra.mxu0 0.0
          %1619 = vmatprep.subr.mxu0 0.0
          %1620 = vmatpush2.msra.mxu0 0.0
          %1621 = vmatprep.subr.mxu0 0.0
          %1622 = vmatpush2.msra.mxu0 0.0
          %1623 = vmatprep.mubr.f32.mxu0 0.0
          %1624 = vmatmul.mubr.f32.gmra.mxu0 %v1544
          %v1625 = vpop.f32.mrf.mxu0
          %v1626 = vadd.f32 0.0, %v1625
          %v1627 = vpop.f32.mrf.mxu0
          %1628 = vmatprep.mubr.f32.mxu0 0.0
          %1629 = vmatmul.mubr.f32.gmra.mxu0 %v1547
          %v1630 = vpop.f32.mrf.mxu0
          %v1631 = vadd.f32 0.0, %v1630
          %v1632 = vpop.f32.mrf.mxu0
          %1633 = vmatprep.mubr.f32.mxu0 0.0
          %1634 = vmatmul.mubr.f32.gmra.mxu0 %v1550
          %v1635 = vpop.f32.mrf.mxu0
          %v1636 = vadd.f32 0.0, %v1635
          %v1637 = vpop.f32.mrf.mxu0
          %1638 = vmatprep.mubr.f32.mxu0 0.0
          %1639 = vmatmul.mubr.f32.gmra.mxu0 %v1553
          %v1640 = vpop.f32.mrf.mxu0
          %v1641 = vadd.f32 0.0, %v1640
          %v1642 = vpop.f32.mrf.mxu0
          %1643 = vdwg.mxu0
          %vm1644 = vcmask 7168
          %1645 = vst.msk [vmem:[#allocation3] sm:$0xff] %vm1644, %v1626
          %1646 = vst.msk [vmem:[#allocation3 + $0x8] sm:$0xff] %vm1644, %v1631
          %1647 = vst.msk [vmem:[#allocation3 + $0x10] sm:$0xff] %vm1644, %v1636
          %1648 = vst.msk [vmem:[#allocation3 + $0x18] sm:$0xff] %vm1644, %v1641
          %v1649 = vld [vmem:[%s6] sm:$0xff]
          %v1650 = vld [vmem:[%s6 + $0x8] sm:$0xff]
          %v1651 = vld [vmem:[%s6 + $0x10] sm:$0xff]
          %v1652 = vld [vmem:[%s6 + $0x18] sm:$0xff]
          %v1654 = vsel %vm1542, %v1649, 0
          %v1657 = vsel %vm1542, %v1650, 0
          %v1660 = vsel %vm1542, %v1651, 0
          %v1663 = vsel %vm1542, %v1652, 0
          %v1666 = vsel %vm1555, %v1537, 0
          %1668 = vmatprep.subr.mxu0 0.0
          %1669 = vmatpush1.msra.mxu0 0.0
          %1670 = vmatprep.subr.mxu0 0.0
          %1671 = vmatpush1.msra.mxu0 0.0
          %1672 = vmatprep.subr.mxu0 0.0
          %1673 = vmatpush1.msra.mxu0 0.0
          %1674 = vmatprep.subr.mxu0 0.0
          %1675 = vmatpush1.msra.mxu0 0.0
          %1676 = vmatprep.subr.mxu0 0.0
          %1677 = vmatpush1.msra.mxu0 0.0
          %1678 = vmatprep.subr.mxu0 0.0
          %1679 = vmatpush1.msra.mxu0 0.0
          %1680 = vmatprep.subr.mxu0 0.0
          %1681 = vmatpush1.msra.mxu0 0.0
          %1682 = vmatprep.subr.mxu0 0.0
          %1683 = vmatpush1.msra.mxu0 0.0
          %1684 = vmatprep.subr.mxu0 0.0
          %1685 = vmatpush1.msra.mxu0 0.0
          %1686 = vmatprep.subr.mxu0 0.0
          %1687 = vmatpush1.msra.mxu0 0.0
          %1688 = vmatprep.subr.mxu0 0.0
          %1689 = vmatpush1.msra.mxu0 0.0
          %1690 = vmatprep.subr.mxu0 0.0
          %1691 = vmatpush1.msra.mxu0 0.0
          %1692 = vmatprep.subr.mxu0 0.0
          %1693 = vmatpush1.msra.mxu0 0.0
          %1694 = vmatprep.subr.mxu0 0.0
          %1695 = vmatpush1.msra.mxu0 0.0
          %1696 = vmatprep.subr.mxu0 0.0
          %1697 = vmatpush1.msra.mxu0 0.0
          %1698 = vmatprep.subr.mxu0 0.0
          %1699 = vmatpush1.msra.mxu0 %v1666
          %1700 = vmatprep.subr.mxu0 0.0
          %1701 = vmatpush2.msra.mxu0 0.0
          %1702 = vmatprep.subr.mxu0 0.0
          %1703 = vmatpush2.msra.mxu0 0.0
          %1704 = vmatprep.subr.mxu0 0.0
          %1705 = vmatpush2.msra.mxu0 0.0
          %1706 = vmatprep.subr.mxu0 0.0
          %1707 = vmatpush2.msra.mxu0 0.0
          %1708 = vmatprep.subr.mxu0 0.0
          %1709 = vmatpush2.msra.mxu0 0.0
          %1710 = vmatprep.subr.mxu0 0.0
          %1711 = vmatpush2.msra.mxu0 0.0
          %1712 = vmatprep.subr.mxu0 0.0
          %1713 = vmatpush2.msra.mxu0 0.0
          %1714 = vmatprep.subr.mxu0 0.0
          %1715 = vmatpush2.msra.mxu0 0.0
          %1716 = vmatprep.subr.mxu0 0.0
          %1717 = vmatpush2.msra.mxu0 0.0
          %1718 = vmatprep.subr.mxu0 0.0
          %1719 = vmatpush2.msra.mxu0 0.0
          %1720 = vmatprep.subr.mxu0 0.0
          %1721 = vmatpush2.msra.mxu0 0.0
          %1722 = vmatprep.subr.mxu0 0.0
          %1723 = vmatpush2.msra.mxu0 0.0
          %1724 = vmatprep.subr.mxu0 0.0
          %1725 = vmatpush2.msra.mxu0 0.0
          %1726 = vmatprep.subr.mxu0 0.0
          %1727 = vmatpush2.msra.mxu0 0.0
          %1728 = vmatprep.subr.mxu0 0.0
          %1729 = vmatpush2.msra.mxu0 0.0
          %1730 = vmatprep.subr.mxu0 0.0
          %1731 = vmatpush2.msra.mxu0 0.0
          %1732 = vmatprep.mubr.f32.mxu0 0.0
          %1733 = vmatmul.mubr.f32.gmra.mxu0 %v1654
          %v1734 = vpop.f32.mrf.mxu0
          %v1735 = vadd.f32 0.0, %v1734
          %v1736 = vpop.f32.mrf.mxu0
          %1737 = vmatprep.mubr.f32.mxu0 0.0
          %1738 = vmatmul.mubr.f32.gmra.mxu0 %v1657
          %v1739 = vpop.f32.mrf.mxu0
          %v1740 = vadd.f32 0.0, %v1739
          %v1741 = vpop.f32.mrf.mxu0
          %1742 = vmatprep.mubr.f32.mxu0 0.0
          %1743 = vmatmul.mubr.f32.gmra.mxu0 %v1660
          %v1744 = vpop.f32.mrf.mxu0
          %v1745 = vadd.f32 0.0, %v1744
          %v1746 = vpop.f32.mrf.mxu0
          %1747 = vmatprep.mubr.f32.mxu0 0.0
          %1748 = vmatmul.mubr.f32.gmra.mxu0 %v1663
          %v1749 = vpop.f32.mrf.mxu0
          %v1750 = vadd.f32 0.0, %v1749
          %v1751 = vpop.f32.mrf.mxu0
          %1752 = vdwg.mxu0
          %s1753 = scalar_lea.vmem [#allocation3], 32
          %1754 = vst.msk [vmem:[%s1753] sm:$0xff] %vm1644, %v1735
          %1755 = vst.msk [vmem:[%s1753 + $0x8] sm:$0xff] %vm1644, %v1740
          %1756 = vst.msk [vmem:[%s1753 + $0x10] sm:$0xff] %vm1644, %v1745
          %1757 = vst.msk [vmem:[%s1753 + $0x18] sm:$0xff] %vm1644, %v1750
        $region92: #{forward.1} parent=59 // pred_fallthru
          _
        %p1758 = scmp.ge.s32.totalorder %s30, 2
        // Predicated region
        $region93: #{forward.1} parent=59 // pred_check
          %p1759 = pneg %p1758
        $region94: #{forward.1} parent=59 // pred_check_branch
          %1761 = sbr.rel (%p1759) target = $region96
        $region95: #{forward.1} parent=59 // pred_region
          %s1762 = ssub.s32 %s30, 2
          %s1763 = smul.u32 %s1762, 32
          %s1764 = scalar_lea.vmem [#allocation2], %s1763
          %v1765 = vld [vmem:[%s1764] sm:$0xff]
          %v1766 = vld [vmem:[%s1764 + $0x8] sm:$0xff]
          %v1767 = vld [vmem:[%s1764 + $0x10] sm:$0xff]
          %v1768 = vld [vmem:[%s1764 + $0x18] sm:$0xff]
          %v1769 = vld [vmem:[#allocation3] sm:$0xff]
          %v1770 = vld [vmem:[#allocation3 + $0x8] sm:$0xff]
          %v1771 = vld [vmem:[#allocation3 + $0x10] sm:$0xff]
          %v1772 = vld [vmem:[#allocation3 + $0x18] sm:$0xff]
          %1774 = vset.pattern.permute.xlu0 0
          %1775 = vperm.xlu0 %1774, %v1769
          %v1776 = vpop.permute.xlu0 %1775
          %1779 = vset.pattern.permute.xlu0 0
          %1780 = vperm.xlu0 %1779, %v1770
          %v1781 = vpop.permute.xlu0 %1780
          %1784 = vset.pattern.permute.xlu0 0
          %1785 = vperm.xlu0 %1784, %v1771
          %v1786 = vpop.permute.xlu0 %1785
          %1789 = vset.pattern.permute.xlu0 0
          %1790 = vperm.xlu0 %1789, %v1772
          %v1791 = vpop.permute.xlu0 %1790
          %v1793 = vmul.f32 %v1765, %v1776
          %v1794 = vmul.f32 %v1766, %v1781
          %v1795 = vmul.f32 %v1767, %v1786
          %v1796 = vmul.f32 %v1768, %v1791
          %s1797 = scalar_lea.vmem [#allocation3], 32
          %v1798 = vld [vmem:[%s1797] sm:$0xff]
          %v1799 = vld [vmem:[%s1797 + $0x8] sm:$0xff]
          %v1800 = vld [vmem:[%s1797 + $0x10] sm:$0xff]
          %v1801 = vld [vmem:[%s1797 + $0x18] sm:$0xff]
          %1803 = vset.pattern.permute.xlu0 0
          %1804 = vperm.xlu0 %1803, %v1798
          %v1805 = vpop.permute.xlu0 %1804
          %1808 = vset.pattern.permute.xlu0 0
          %1809 = vperm.xlu0 %1808, %v1799
          %v1810 = vpop.permute.xlu0 %1809
          %1813 = vset.pattern.permute.xlu0 0
          %1814 = vperm.xlu0 %1813, %v1800
          %v1815 = vpop.permute.xlu0 %1814
          %1818 = vset.pattern.permute.xlu0 0
          %1819 = vperm.xlu0 %1818, %v1801
          %v1820 = vpop.permute.xlu0 %1819
          %v1822 = vadd.f32 %v1793, %v1805
          %v1823 = vadd.f32 %v1794, %v1810
          %v1824 = vadd.f32 %v1795, %v1815
          %v1825 = vadd.f32 %v1796, %v1820
          %v1826 = vmax.f32 %v1822, 0.0
          %v1827 = vmax.f32 %v1823, 0.0
          %v1828 = vmax.f32 %v1824, 0.0
          %v1829 = vmax.f32 %v1825, 0.0
          %v1830 = vld [vmem:[#allocation10] sm:$0xff]
          %vm1831 = vcmask 64512
          %v1833 = vsel %vm1831, %v1826, 0
          %v1836 = vsel %vm1831, %v1827, 0
          %v1839 = vsel %vm1831, %v1828, 0
          %v1842 = vsel %vm1831, %v1829, 0
          %1844 = vmatprep.subr.mxu0 0.0
          %1845 = vmatpush1.msra.mxu0 0.0
          %1846 = vmatprep.subr.mxu0 0.0
          %1847 = vmatpush1.msra.mxu0 0.0
          %1848 = vmatprep.subr.mxu0 0.0
          %1849 = vmatpush1.msra.mxu0 0.0
          %1850 = vmatprep.subr.mxu0 0.0
          %1851 = vmatpush1.msra.mxu0 0.0
          %1852 = vmatprep.subr.mxu0 0.0
          %1853 = vmatpush1.msra.mxu0 0.0
          %1854 = vmatprep.subr.mxu0 0.0
          %1855 = vmatpush1.msra.mxu0 0.0
          %1856 = vmatprep.subr.mxu0 0.0
          %1857 = vmatpush1.msra.mxu0 0.0
          %1858 = vmatprep.subr.mxu0 0.0
          %1859 = vmatpush1.msra.mxu0 0.0
          %1860 = vmatprep.subr.mxu0 0.0
          %1861 = vmatpush1.msra.mxu0 0.0
          %1862 = vmatprep.subr.mxu0 0.0
          %1863 = vmatpush1.msra.mxu0 0.0
          %1864 = vmatprep.subr.mxu0 0.0
          %1865 = vmatpush1.msra.mxu0 0.0
          %1866 = vmatprep.subr.mxu0 0.0
          %1867 = vmatpush1.msra.mxu0 0.0
          %1868 = vmatprep.subr.mxu0 0.0
          %1869 = vmatpush1.msra.mxu0 0.0
          %1870 = vmatprep.subr.mxu0 0.0
          %1871 = vmatpush1.msra.mxu0 0.0
          %1872 = vmatprep.subr.mxu0 0.0
          %1873 = vmatpush1.msra.mxu0 0.0
          %1874 = vmatprep.subr.mxu0 0.0
          %1875 = vmatpush1.msra.mxu0 %v1830
          %1876 = vmatprep.subr.mxu0 0.0
          %1877 = vmatpush2.msra.mxu0 0.0
          %1878 = vmatprep.subr.mxu0 0.0
          %1879 = vmatpush2.msra.mxu0 0.0
          %1880 = vmatprep.subr.mxu0 0.0
          %1881 = vmatpush2.msra.mxu0 0.0
          %1882 = vmatprep.subr.mxu0 0.0
          %1883 = vmatpush2.msra.mxu0 0.0
          %1884 = vmatprep.subr.mxu0 0.0
          %1885 = vmatpush2.msra.mxu0 0.0
          %1886 = vmatprep.subr.mxu0 0.0
          %1887 = vmatpush2.msra.mxu0 0.0
          %1888 = vmatprep.subr.mxu0 0.0
          %1889 = vmatpush2.msra.mxu0 0.0
          %1890 = vmatprep.subr.mxu0 0.0
          %1891 = vmatpush2.msra.mxu0 0.0
          %1892 = vmatprep.subr.mxu0 0.0
          %1893 = vmatpush2.msra.mxu0 0.0
          %1894 = vmatprep.subr.mxu0 0.0
          %1895 = vmatpush2.msra.mxu0 0.0
          %1896 = vmatprep.subr.mxu0 0.0
          %1897 = vmatpush2.msra.mxu0 0.0
          %1898 = vmatprep.subr.mxu0 0.0
          %1899 = vmatpush2.msra.mxu0 0.0
          %1900 = vmatprep.subr.mxu0 0.0
          %1901 = vmatpush2.msra.mxu0 0.0
          %1902 = vmatprep.subr.mxu0 0.0
          %1903 = vmatpush2.msra.mxu0 0.0
          %1904 = vmatprep.subr.mxu0 0.0
          %1905 = vmatpush2.msra.mxu0 0.0
          %1906 = vmatprep.subr.mxu0 0.0
          %1907 = vmatpush2.msra.mxu0 0.0
          %1908 = vmatprep.mubr.f32.mxu0 0.0
          %1909 = vmatmul.mubr.f32.gmra.mxu0 %v1833
          %v1910 = vpop.f32.mrf.mxu0
          %v1911 = vadd.f32 0.0, %v1910
          %v1912 = vpop.f32.mrf.mxu0
          %1913 = vmatprep.mubr.f32.mxu0 0.0
          %1914 = vmatmul.mubr.f32.gmra.mxu0 %v1836
          %v1915 = vpop.f32.mrf.mxu0
          %v1916 = vadd.f32 0.0, %v1915
          %v1917 = vpop.f32.mrf.mxu0
          %1918 = vmatprep.mubr.f32.mxu0 0.0
          %1919 = vmatmul.mubr.f32.gmra.mxu0 %v1839
          %v1920 = vpop.f32.mrf.mxu0
          %v1921 = vadd.f32 0.0, %v1920
          %v1922 = vpop.f32.mrf.mxu0
          %1923 = vmatprep.mubr.f32.mxu0 0.0
          %1924 = vmatmul.mubr.f32.gmra.mxu0 %v1842
          %v1925 = vpop.f32.mrf.mxu0
          %v1926 = vadd.f32 0.0, %v1925
          %v1927 = vpop.f32.mrf.mxu0
          %1928 = vdwg.mxu0
          %v1929 = vld [vmem:[#allocation12] sm:$0xff]
          %v1930 = vld [vmem:[#allocation12 + $0x8] sm:$0xff]
          %v1932 = vsel %vm1831, %v1929, 0
          %v1935 = vsel %vm1831, %v1930, 0
          %1937 = vmatprep.subr.mxu0 0.0
          %1938 = vmatpush1.msra.mxu0 0.0
          %1939 = vmatprep.subr.mxu0 0.0
          %1940 = vmatpush1.msra.mxu0 0.0
          %1941 = vmatprep.subr.mxu0 0.0
          %1942 = vmatpush1.msra.mxu0 0.0
          %1943 = vmatprep.subr.mxu0 0.0
          %1944 = vmatpush1.msra.mxu0 0.0
          %1945 = vmatprep.subr.mxu0 0.0
          %1946 = vmatpush1.msra.mxu0 0.0
          %1947 = vmatprep.subr.mxu0 0.0
          %1948 = vmatpush1.msra.mxu0 0.0
          %1949 = vmatprep.subr.mxu0 0.0
          %1950 = vmatpush1.msra.mxu0 0.0
          %1951 = vmatprep.subr.mxu0 0.0
          %1952 = vmatpush1.msra.mxu0 0.0
          %1953 = vmatprep.subr.mxu0 0.0
          %1954 = vmatpush1.msra.mxu0 0.0
          %1955 = vmatprep.subr.mxu0 0.0
          %1956 = vmatpush1.msra.mxu0 0.0
          %1957 = vmatprep.subr.mxu0 0.0
          %1958 = vmatpush1.msra.mxu0 0.0
          %1959 = vmatprep.subr.mxu0 0.0
          %1960 = vmatpush1.msra.mxu0 0.0
          %1961 = vmatprep.subr.mxu0 0.0
          %1962 = vmatpush1.msra.mxu0 0.0
          %1963 = vmatprep.subr.mxu0 0.0
          %1964 = vmatpush1.msra.mxu0 0.0
          %1965 = vmatprep.subr.mxu0 0.0
          %1966 = vmatpush1.msra.mxu0 0.0
          %1967 = vmatprep.subr.mxu0 0.0
          %1968 = vmatpush1.msra.mxu0 %v1911
          %1969 = vmatprep.subr.mxu0 0.0
          %1970 = vmatpush2.msra.mxu0 0.0
          %1971 = vmatprep.subr.mxu0 0.0
          %1972 = vmatpush2.msra.mxu0 0.0
          %1973 = vmatprep.subr.mxu0 0.0
          %1974 = vmatpush2.msra.mxu0 0.0
          %1975 = vmatprep.subr.mxu0 0.0
          %1976 = vmatpush2.msra.mxu0 0.0
          %1977 = vmatprep.subr.mxu0 0.0
          %1978 = vmatpush2.msra.mxu0 0.0
          %1979 = vmatprep.subr.mxu0 0.0
          %1980 = vmatpush2.msra.mxu0 0.0
          %1981 = vmatprep.subr.mxu0 0.0
          %1982 = vmatpush2.msra.mxu0 0.0
          %1983 = vmatprep.subr.mxu0 0.0
          %1984 = vmatpush2.msra.mxu0 0.0
          %1985 = vmatprep.subr.mxu0 0.0
          %1986 = vmatpush2.msra.mxu0 0.0
          %1987 = vmatprep.subr.mxu0 0.0
          %1988 = vmatpush2.msra.mxu0 0.0
          %1989 = vmatprep.subr.mxu0 0.0
          %1990 = vmatpush2.msra.mxu0 0.0
          %1991 = vmatprep.subr.mxu0 0.0
          %1992 = vmatpush2.msra.mxu0 0.0
          %1993 = vmatprep.subr.mxu0 0.0
          %1994 = vmatpush2.msra.mxu0 0.0
          %1995 = vmatprep.subr.mxu0 0.0
          %1996 = vmatpush2.msra.mxu0 0.0
          %1997 = vmatprep.subr.mxu0 0.0
          %1998 = vmatpush2.msra.mxu0 0.0
          %1999 = vmatprep.subr.mxu0 0.0
          %2000 = vmatpush2.msra.mxu0 0.0
          %2001 = vmatprep.mubr.f32.mxu0 0.0
          %2002 = vmatmul.mubr.f32.gmra.mxu0 %v1932
          %v2003 = vpop.f32.mrf.mxu0
          %v2004 = vadd.f32 0.0, %v2003
          %v2005 = vpop.f32.mrf.mxu0
          %2006 = vmatprep.mubr.f32.mxu0 0.0
          %2007 = vmatmul.mubr.f32.gmra.mxu0 %v1935
          %v2008 = vpop.f32.mrf.mxu0
          %v2009 = vadd.f32 0.0, %v2008
          %v2010 = vpop.f32.mrf.mxu0
          %2011 = vdwg.mxu0
          %vm2012 = vcmask 130048
          %2013 = vst.msk [vmem:[%s458] sm:$0xff] %vm2012, %v2004
          %2014 = vst.msk [vmem:[%s458 + $0x8] sm:$0xff] %vm2012, %v2009
          %v2015 = vld [vmem:[#allocation12] sm:$0xff]
          %v2016 = vld [vmem:[#allocation12 + $0x8] sm:$0xff]
          %v2018 = vsel %vm1831, %v2015, 0
          %v2021 = vsel %vm1831, %v2016, 0
          %2023 = vmatprep.subr.mxu0 0.0
          %2024 = vmatpush1.msra.mxu0 0.0
          %2025 = vmatprep.subr.mxu0 0.0
          %2026 = vmatpush1.msra.mxu0 0.0
          %2027 = vmatprep.subr.mxu0 0.0
          %2028 = vmatpush1.msra.mxu0 0.0
          %2029 = vmatprep.subr.mxu0 0.0
          %2030 = vmatpush1.msra.mxu0 0.0
          %2031 = vmatprep.subr.mxu0 0.0
          %2032 = vmatpush1.msra.mxu0 0.0
          %2033 = vmatprep.subr.mxu0 0.0
          %2034 = vmatpush1.msra.mxu0 0.0
          %2035 = vmatprep.subr.mxu0 0.0
          %2036 = vmatpush1.msra.mxu0 0.0
          %2037 = vmatprep.subr.mxu0 0.0
          %2038 = vmatpush1.msra.mxu0 0.0
          %2039 = vmatprep.subr.mxu0 0.0
          %2040 = vmatpush1.msra.mxu0 0.0
          %2041 = vmatprep.subr.mxu0 0.0
          %2042 = vmatpush1.msra.mxu0 0.0
          %2043 = vmatprep.subr.mxu0 0.0
          %2044 = vmatpush1.msra.mxu0 0.0
          %2045 = vmatprep.subr.mxu0 0.0
          %2046 = vmatpush1.msra.mxu0 0.0
          %2047 = vmatprep.subr.mxu0 0.0
          %2048 = vmatpush1.msra.mxu0 0.0
          %2049 = vmatprep.subr.mxu0 0.0
          %2050 = vmatpush1.msra.mxu0 0.0
          %2051 = vmatprep.subr.mxu0 0.0
          %2052 = vmatpush1.msra.mxu0 0.0
          %2053 = vmatprep.subr.mxu0 0.0
          %2054 = vmatpush1.msra.mxu0 %v1916
          %2055 = vmatprep.subr.mxu0 0.0
          %2056 = vmatpush2.msra.mxu0 0.0
          %2057 = vmatprep.subr.mxu0 0.0
          %2058 = vmatpush2.msra.mxu0 0.0
          %2059 = vmatprep.subr.mxu0 0.0
          %2060 = vmatpush2.msra.mxu0 0.0
          %2061 = vmatprep.subr.mxu0 0.0
          %2062 = vmatpush2.msra.mxu0 0.0
          %2063 = vmatprep.subr.mxu0 0.0
          %2064 = vmatpush2.msra.mxu0 0.0
          %2065 = vmatprep.subr.mxu0 0.0
          %2066 = vmatpush2.msra.mxu0 0.0
          %2067 = vmatprep.subr.mxu0 0.0
          %2068 = vmatpush2.msra.mxu0 0.0
          %2069 = vmatprep.subr.mxu0 0.0
          %2070 = vmatpush2.msra.mxu0 0.0
          %2071 = vmatprep.subr.mxu0 0.0
          %2072 = vmatpush2.msra.mxu0 0.0
          %2073 = vmatprep.subr.mxu0 0.0
          %2074 = vmatpush2.msra.mxu0 0.0
          %2075 = vmatprep.subr.mxu0 0.0
          %2076 = vmatpush2.msra.mxu0 0.0
          %2077 = vmatprep.subr.mxu0 0.0
          %2078 = vmatpush2.msra.mxu0 0.0
          %2079 = vmatprep.subr.mxu0 0.0
          %2080 = vmatpush2.msra.mxu0 0.0
          %2081 = vmatprep.subr.mxu0 0.0
          %2082 = vmatpush2.msra.mxu0 0.0
          %2083 = vmatprep.subr.mxu0 0.0
          %2084 = vmatpush2.msra.mxu0 0.0
          %2085 = vmatprep.subr.mxu0 0.0
          %2086 = vmatpush2.msra.mxu0 0.0
          %2087 = vmatprep.mubr.f32.mxu0 0.0
          %2088 = vmatmul.mubr.f32.gmra.mxu0 %v2018
          %v2089 = vpop.f32.mrf.mxu0
          %v2090 = vadd.f32 0.0, %v2089
          %v2091 = vpop.f32.mrf.mxu0
          %2092 = vmatprep.mubr.f32.mxu0 0.0
          %2093 = vmatmul.mubr.f32.gmra.mxu0 %v2021
          %v2094 = vpop.f32.mrf.mxu0
          %v2095 = vadd.f32 0.0, %v2094
          %v2096 = vpop.f32.mrf.mxu0
          %2097 = vdwg.mxu0
          %s2098 = scalar_lea.vmem %s458, 16 [#allocation15]
          %2099 = vst.msk [vmem:[%s2098] sm:$0xff] %vm2012, %v2090
          %2100 = vst.msk [vmem:[%s2098 + $0x8] sm:$0xff] %vm2012, %v2095
          %v2101 = vld [vmem:[#allocation12] sm:$0xff]
          %v2102 = vld [vmem:[#allocation12 + $0x8] sm:$0xff]
          %v2104 = vsel %vm1831, %v2101, 0
          %v2107 = vsel %vm1831, %v2102, 0
          %2109 = vmatprep.subr.mxu0 0.0
          %2110 = vmatpush1.msra.mxu0 0.0
          %2111 = vmatprep.subr.mxu0 0.0
          %2112 = vmatpush1.msra.mxu0 0.0
          %2113 = vmatprep.subr.mxu0 0.0
          %2114 = vmatpush1.msra.mxu0 0.0
          %2115 = vmatprep.subr.mxu0 0.0
          %2116 = vmatpush1.msra.mxu0 0.0
          %2117 = vmatprep.subr.mxu0 0.0
          %2118 = vmatpush1.msra.mxu0 0.0
          %2119 = vmatprep.subr.mxu0 0.0
          %2120 = vmatpush1.msra.mxu0 0.0
          %2121 = vmatprep.subr.mxu0 0.0
          %2122 = vmatpush1.msra.mxu0 0.0
          %2123 = vmatprep.subr.mxu0 0.0
          %2124 = vmatpush1.msra.mxu0 0.0
          %2125 = vmatprep.subr.mxu0 0.0
          %2126 = vmatpush1.msra.mxu0 0.0
          %2127 = vmatprep.subr.mxu0 0.0
          %2128 = vmatpush1.msra.mxu0 0.0
          %2129 = vmatprep.subr.mxu0 0.0
          %2130 = vmatpush1.msra.mxu0 0.0
          %2131 = vmatprep.subr.mxu0 0.0
          %2132 = vmatpush1.msra.mxu0 0.0
          %2133 = vmatprep.subr.mxu0 0.0
          %2134 = vmatpush1.msra.mxu0 0.0
          %2135 = vmatprep.subr.mxu0 0.0
          %2136 = vmatpush1.msra.mxu0 0.0
          %2137 = vmatprep.subr.mxu0 0.0
          %2138 = vmatpush1.msra.mxu0 0.0
          %2139 = vmatprep.subr.mxu0 0.0
          %2140 = vmatpush1.msra.mxu0 %v1921
          %2141 = vmatprep.subr.mxu0 0.0
          %2142 = vmatpush2.msra.mxu0 0.0
          %2143 = vmatprep.subr.mxu0 0.0
          %2144 = vmatpush2.msra.mxu0 0.0
          %2145 = vmatprep.subr.mxu0 0.0
          %2146 = vmatpush2.msra.mxu0 0.0
          %2147 = vmatprep.subr.mxu0 0.0
          %2148 = vmatpush2.msra.mxu0 0.0
          %2149 = vmatprep.subr.mxu0 0.0
          %2150 = vmatpush2.msra.mxu0 0.0
          %2151 = vmatprep.subr.mxu0 0.0
          %2152 = vmatpush2.msra.mxu0 0.0
          %2153 = vmatprep.subr.mxu0 0.0
          %2154 = vmatpush2.msra.mxu0 0.0
          %2155 = vmatprep.subr.mxu0 0.0
          %2156 = vmatpush2.msra.mxu0 0.0
          %2157 = vmatprep.subr.mxu0 0.0
          %2158 = vmatpush2.msra.mxu0 0.0
          %2159 = vmatprep.subr.mxu0 0.0
          %2160 = vmatpush2.msra.mxu0 0.0
          %2161 = vmatprep.subr.mxu0 0.0
          %2162 = vmatpush2.msra.mxu0 0.0
          %2163 = vmatprep.subr.mxu0 0.0
          %2164 = vmatpush2.msra.mxu0 0.0
          %2165 = vmatprep.subr.mxu0 0.0
          %2166 = vmatpush2.msra.mxu0 0.0
          %2167 = vmatprep.subr.mxu0 0.0
          %2168 = vmatpush2.msra.mxu0 0.0
          %2169 = vmatprep.subr.mxu0 0.0
          %2170 = vmatpush2.msra.mxu0 0.0
          %2171 = vmatprep.subr.mxu0 0.0
          %2172 = vmatpush2.msra.mxu0 0.0
          %2173 = vmatprep.mubr.f32.mxu0 0.0
          %2174 = vmatmul.mubr.f32.gmra.mxu0 %v2104
          %v2175 = vpop.f32.mrf.mxu0
          %v2176 = vadd.f32 0.0, %v2175
          %v2177 = vpop.f32.mrf.mxu0
          %2178 = vmatprep.mubr.f32.mxu0 0.0
          %2179 = vmatmul.mubr.f32.gmra.mxu0 %v2107
          %v2180 = vpop.f32.mrf.mxu0
          %v2181 = vadd.f32 0.0, %v2180
          %v2182 = vpop.f32.mrf.mxu0
          %2183 = vdwg.mxu0
          %s2184 = scalar_lea.vmem %s458, 32 [#allocation15]
          %2185 = vst.msk [vmem:[%s2184] sm:$0xff] %vm2012, %v2176
          %2186 = vst.msk [vmem:[%s2184 + $0x8] sm:$0xff] %vm2012, %v2181
          %v2187 = vld [vmem:[#allocation12] sm:$0xff]
          %v2188 = vld [vmem:[#allocation12 + $0x8] sm:$0xff]
          %v2190 = vsel %vm1831, %v2187, 0
          %v2193 = vsel %vm1831, %v2188, 0
          %2195 = vmatprep.subr.mxu0 0.0
          %2196 = vmatpush1.msra.mxu0 0.0
          %2197 = vmatprep.subr.mxu0 0.0
          %2198 = vmatpush1.msra.mxu0 0.0
          %2199 = vmatprep.subr.mxu0 0.0
          %2200 = vmatpush1.msra.mxu0 0.0
          %2201 = vmatprep.subr.mxu0 0.0
          %2202 = vmatpush1.msra.mxu0 0.0
          %2203 = vmatprep.subr.mxu0 0.0
          %2204 = vmatpush1.msra.mxu0 0.0
          %2205 = vmatprep.subr.mxu0 0.0
          %2206 = vmatpush1.msra.mxu0 0.0
          %2207 = vmatprep.subr.mxu0 0.0
          %2208 = vmatpush1.msra.mxu0 0.0
          %2209 = vmatprep.subr.mxu0 0.0
          %2210 = vmatpush1.msra.mxu0 0.0
          %2211 = vmatprep.subr.mxu0 0.0
          %2212 = vmatpush1.msra.mxu0 0.0
          %2213 = vmatprep.subr.mxu0 0.0
          %2214 = vmatpush1.msra.mxu0 0.0
          %2215 = vmatprep.subr.mxu0 0.0
          %2216 = vmatpush1.msra.mxu0 0.0
          %2217 = vmatprep.subr.mxu0 0.0
          %2218 = vmatpush1.msra.mxu0 0.0
          %2219 = vmatprep.subr.mxu0 0.0
          %2220 = vmatpush1.msra.mxu0 0.0
          %2221 = vmatprep.subr.mxu0 0.0
          %2222 = vmatpush1.msra.mxu0 0.0
          %2223 = vmatprep.subr.mxu0 0.0
          %2224 = vmatpush1.msra.mxu0 0.0
          %2225 = vmatprep.subr.mxu0 0.0
          %2226 = vmatpush1.msra.mxu0 %v1926
          %2227 = vmatprep.subr.mxu0 0.0
          %2228 = vmatpush2.msra.mxu0 0.0
          %2229 = vmatprep.subr.mxu0 0.0
          %2230 = vmatpush2.msra.mxu0 0.0
          %2231 = vmatprep.subr.mxu0 0.0
          %2232 = vmatpush2.msra.mxu0 0.0
          %2233 = vmatprep.subr.mxu0 0.0
          %2234 = vmatpush2.msra.mxu0 0.0
          %2235 = vmatprep.subr.mxu0 0.0
          %2236 = vmatpush2.msra.mxu0 0.0
          %2237 = vmatprep.subr.mxu0 0.0
          %2238 = vmatpush2.msra.mxu0 0.0
          %2239 = vmatprep.subr.mxu0 0.0
          %2240 = vmatpush2.msra.mxu0 0.0
          %2241 = vmatprep.subr.mxu0 0.0
          %2242 = vmatpush2.msra.mxu0 0.0
          %2243 = vmatprep.subr.mxu0 0.0
          %2244 = vmatpush2.msra.mxu0 0.0
          %2245 = vmatprep.subr.mxu0 0.0
          %2246 = vmatpush2.msra.mxu0 0.0
          %2247 = vmatprep.subr.mxu0 0.0
          %2248 = vmatpush2.msra.mxu0 0.0
          %2249 = vmatprep.subr.mxu0 0.0
          %2250 = vmatpush2.msra.mxu0 0.0
          %2251 = vmatprep.subr.mxu0 0.0
          %2252 = vmatpush2.msra.mxu0 0.0
          %2253 = vmatprep.subr.mxu0 0.0
          %2254 = vmatpush2.msra.mxu0 0.0
          %2255 = vmatprep.subr.mxu0 0.0
          %2256 = vmatpush2.msra.mxu0 0.0
          %2257 = vmatprep.subr.mxu0 0.0
          %2258 = vmatpush2.msra.mxu0 0.0
          %2259 = vmatprep.mubr.f32.mxu0 0.0
          %2260 = vmatmul.mubr.f32.gmra.mxu0 %v2190
          %v2261 = vpop.f32.mrf.mxu0
          %v2262 = vadd.f32 0.0, %v2261
          %v2263 = vpop.f32.mrf.mxu0
          %2264 = vmatprep.mubr.f32.mxu0 0.0
          %2265 = vmatmul.mubr.f32.gmra.mxu0 %v2193
          %v2266 = vpop.f32.mrf.mxu0
          %v2267 = vadd.f32 0.0, %v2266
          %v2268 = vpop.f32.mrf.mxu0
          %2269 = vdwg.mxu0
          %s2270 = scalar_lea.vmem %s458, 48 [#allocation15]
          %2271 = vst.msk [vmem:[%s2270] sm:$0xff] %vm2012, %v2262
          %2272 = vst.msk [vmem:[%s2270 + $0x8] sm:$0xff] %vm2012, %v2267
        $region96: #{forward.1} parent=59 // pred_fallthru
          _
        %s2273 = sand.u32 %s263, 1
        %s2274 = scalar_lea.sflag [#allocation6], %s2273
        %s2275 = sand.u32 %s263, 1
        %s2276 = smul.addr %s2275, 64
        %s2277 = scalar_lea.vmem [#allocation15], %s2276
        // Predicated region
        $region97: #{forward.1} parent=59 // pred_check
          %p2278 = pneg %p273
        $region98: #{forward.1} parent=59 // pred_check_branch
          %2280 = sbr.rel (%p2278) target = $region100
        $region99: #{forward.1} parent=59 // pred_region
          %s2281 = ssub.s32 %s30, 2
          %p2282 = scmp.gt.s32.totalorder %s2281, 0
          %s2283 = scalar_select %p2282, %s2281, 0
          %s2285 = ssub.s32 1024, 1024
          %2286 = vsyncadd %s2274, %s2285
          %s2287 = smul.addr %s2283, 8
          %s2288 = smul.addr %s2287, 128
          %s2289 = scalar_lea.hbm %s10, %s2288
          %s2290 = sshll.u32 %s2277, 4
          %s2291 = int_to_ptr.vmem [resolvable:$true] %s2290
          %2296 = dma.vmem_to_hbm [thread:$0]  %s2291, 1024, %s2289, %s2274, 128, 128, 8
        $region100: #{forward.1} parent=59 // pred_fallthru
          _
      $region60: #{forward.1} parent=5 // pred_fallthru
        _
      %p2297 = scmp.le.s32.totalorder 2, %s25
      // Predicated region
      $region101: #{forward.1} parent=5 // pred_check
        %p2298 = pneg %p2297
      $region102: #{forward.1} parent=5 // pred_check_branch
        %2300 = sbr.rel (%p2298) target = $region104
      $region103: #{forward.1} parent=5 // pred_region
        %s2301 = ssub.s32 %s25, 2
        // Predicated region
        $region105: #{forward.1} parent=103 // pred_check
          %p2302 = pneg %p279
        $region106: #{forward.1} parent=103 // pred_check_branch
          %2304 = sbr.rel (%p2302) target = $region108
        $region107: #{forward.1} parent=103 // pred_region
          %s2305 = sand.u32 %s264, 1
          %s2306 = scalar_lea.sflag [#allocation6], %s2305
          %s2307 = sand.u32 %s264, 1
          %s2308 = smul.addr %s2307, 64
          %s2309 = scalar_lea.vmem [#allocation15], %s2308
          %2310 = dma.done %s2306, 1024
        $region108: #{forward.1} parent=103 // pred_fallthru
          _
      $region104: #{forward.1} parent=5 // pred_fallthru
        _
    $region6: #{forward.1} parent=1 // loop_footer
      %s29 = sadd.s32 1, %s25
    $region7: #{forward.1} parent=1 // loop_footer_branch
      %24 = sbr.rel target = $region3
    $region8: #{forward.1} parent=1 // loop_exit
      _
    %2311 = vsyncpa [#allocation5], 1
    %s2312 = scalar_lea.sflag [#allocation5], 1
    %2313 = vsyncpa %s2312, 1
    %2314 = vsyncpa [#allocation8], 1
    %2315 = vsyncpa [#allocation11], 1
    %2316 = vsyncpa [#allocation14], 1
    %2317 = vsyncpa [#allocation6], 1
    %s2318 = scalar_lea.sflag [#allocation6], 1
    %2319 = vsyncpa %s2318, 1

</llo_original>
